<compile_context>
chip_gen: v6e
topology: v6e:2x2x1
jax: 0.10.0
libtpu: 0.0.40
codegen_flags: <defaults>
</compile_context>

<pallas_src>
import functools
import numpy as np
import jax
import jax.numpy as jnp
from jax.experimental import pallas as pl
from jax.experimental.pallas import tpu as pltpu


def _round_up(x, m):
    return -(-x // m) * m


def _vmem_per_core_bytes():
    """Per-TensorCore VMEM capacity (defensive across v5e / v6e / v7x)."""
    cap = 64 << 20
    try:
        info = pltpu.get_tpu_info()
        c = getattr(info, "vmem_capacity_bytes", None)
        if c:
            cap = int(c)
        try:
            ver = str(getattr(info, "chip_version", "") or "")
        except Exception:
            ver = ""
        # v7x has 2 TensorCores with 64 MiB VMEM each; if the reported capacity is a
        # per-chip figure, clamp to the per-core number.
        if "7" in ver:
            cap = min(cap, 64 << 20)
    except Exception:
        pass
    return int(min(max(cap, 32 << 20), 128 << 20))


def _pick_tiles(n_nodes, n_edges, force_col_tile=None):
    """Choose (tm, tn, te, n_pad, e_pad, single_col, edges_resident, vmem_limit)."""
    vmem_per_core = _vmem_per_core_bytes()
    budget = int(0.70 * vmem_per_core)
    big_vmem = vmem_per_core >= (100 << 20)          # v5e / v6e: 128 MiB per core

    n128 = _round_up(max(n_nodes, 1), 128)

    # Row tile: multiples of 256 fill the 256x256 MXU on v6e/v7x; once the graph is big
    # enough we keep >= 2 row blocks so v7x's two TensorCores both get work.
    if n128 <= 256:
        tm = n128
    elif n128 < 1024:
        tm = 256
    else:
        tm = 512

    # Edge chunk (reduction axis), lane-major multiples of 256.
    te = 1024 if big_vmem else 512
    te = min(te, _round_up(max(n_edges, 1), 256))

    single_cap = 4096 if big_vmem else 2048          # widest single column block

    def layout(tm_, tn_req, te_):
        if tn_req is None:
            n_pad_ = _round_up(n128, tm_)
            if n_pad_ <= single_cap:
                tn_ = n_pad_                          # single column block
            else:
                tn_ = 2048 if big_vmem else 1024
                base = _round_up(n128, max(tm_, 256))
                while tn_ > 512 and _round_up(n128, max(tm_, tn_)) > 1.25 * base:
                    tn_ //= 2
                n_pad_ = _round_up(n128, max(tm_, tn_))
        else:
            tn_ = int(tn_req)
            n_pad_ = _round_up(n128, max(tm_, tn_))
            tn_ = min(tn_, n_pad_)
        single_ = tn_ == n_pad_
        e_pad_ = _round_up(max(n_edges, 1), te_)
        resident_ = 16 * e_pad_ <= budget // 8        # 2 streams x 2 bufs x int32
        edge_bytes = 16 * e_pad_ if resident_ else 16 * te_
        est_ = (3 * tm_ * tn_ * 4                     # double-buffered out block + f32 acc
                + 6 * (tm_ + tn_) * te_               # bf16 one-hots + compare temporaries
                + edge_bytes + (4 << 20))             # Mosaic internal scratch headroom
        return tm_, tn_, te_, n_pad_, e_pad_, single_, resident_, est_

    tn_req = force_col_tile
    while True:
        (tm_f, tn_f, te_f, n_pad, e_pad,
         single_col, edges_resident, est) = layout(tm, tn_req, te)
        if est <= budget:
            break
        if te > 256:
            te = max(256, _round_up(te // 2, 256))
        elif tn_f > 256:
            tn_req = 1024 if tn_f > 1024 else (512 if tn_f > 512 else 256)
        elif tm > 128:
            tm //= 2
        else:
            break

    vmem_limit = int(min(int(0.8 * vmem_per_core), max(32 << 20, 2 * est)))
    return tm_f, tn_f, te_f, n_pad, e_pad, single_col, edges_resident, vmem_limit


def _adj_kernel(src_ref, dst_ref, adj_ref, at_acc, *, te, edges_resident, normalize):
    """(row block i, col block j, edge chunk k) step of max(A, A^T) + I [row-normalized].

    src_ref, dst_ref : int32 edge endpoints, lane-major. (1, E_pad) if resident,
                       else the current (1, TE) chunk. Invalid / padded edges are -1.
    adj_ref          : (TM, TN) f32 output block, resident across k (accumulates A).
    at_acc           : (TM, TN) f32 scratch accumulating the A^T contribution.
    """
    i = pl.program_id(0)
    j = pl.program_id(1)
    k = pl.program_id(2)
    tm, tn = adj_ref.shape

    @pl.when(k == 0)
    def _():
        adj_ref[...] = jnp.zeros_like(adj_ref)
        at_acc[...] = jnp.zeros_like(at_acc)

    if edges_resident:
        off = pl.multiple_of(k * te, te)
        src = src_ref[:, pl.ds(off, te)]               # (1, TE) int32
        dst = dst_ref[:, pl.ds(off, te)]
    else:
        src = src_ref[...]                             # already the (1, TE) chunk
        dst = dst_ref[...]

    # Column-vector iotas; the compares broadcast (TM,1)x(1,TE) -> (TM,TE), so no
    # (TM,TE)/(TN,TE) int32 iota temporaries are materialized.
    row_ids = jax.lax.broadcasted_iota(jnp.int32, (tm, 1), 0) + i * tm
    col_ids = jax.lax.broadcasted_iota(jnp.int32, (tn, 1), 0) + j * tn

    # Invalid edges carry -1 endpoints, which never match an id -> masking is free.
    r_src = (row_ids == src).astype(jnp.bfloat16)      # (TM, TE)
    r_dst = (row_ids == dst).astype(jnp.bfloat16)      # (TM, TE)
    c_dst = (col_ids == dst).astype(jnp.bfloat16)      # (TN, TE)
    c_src = (col_ids == src).astype(jnp.bfloat16)      # (TN, TE)

    # Contract the edge axis (last dim of both operands) on the MXU; f32 accumulation.
    dims = (((1,), (1,)), ((), ()))
    adj_ref[...] += jax.lax.dot_general(r_src, c_dst, dims,
                                        preferred_element_type=jnp.float32)
    at_acc[...] += jax.lax.dot_general(r_dst, c_src, dims,
                                       preferred_element_type=jnp.float32)

    @pl.when(k == pl.num_programs(2) - 1)
    def _():
        # Symmetrize with an elementwise max (no XLU transpose); self loops only on this
        # block's own diagonal entries.
        s = jnp.maximum(adj_ref[...], at_acc[...])
        row = jax.lax.broadcasted_iota(jnp.int32, (tm, 1), 0) + i * tm
        col = jax.lax.broadcasted_iota(jnp.int32, (1, tn), 1) + j * tn
        s = s + (row == col).astype(jnp.float32)
        if normalize:
            # Single column block: the full row is here. rowsum >= 1 (self loop), so no
            # zero guard is needed.
            rowsum = jnp.sum(s, axis=1, keepdims=True)
            rinv = pl.reciprocal(rowsum, approx=True)       # EUP slot
            rinv = rinv * (2.0 - rowsum * rinv)             # two Newton refinements on a
            rinv = rinv * (2.0 - rowsum * rinv)             # (TM,1) vector -> f32-exact
            adj_ref[...] = s * rinv
        else:
            adj_ref[...] = s


def mend_graph_forward(org_feats, org_edges, pred_missing, gen_feats,
                       *, num_pred, feat_shape, force_col_tile=None):
    """JAX/Pallas equivalent of MendGraph.forward.

    Returns (fill_feats, adj_dense):
      fill_feats: (org_node_len * (1 + num_pred), feat_shape) float32
      adj_dense : (N, N) float32, N = org_node_len * (1 + num_pred)
    """
    n0 = org_feats.shape[0]
    n_nodes = n0 + n0 * num_pred

    # --- glue: torch.vstack((org_feats, gen_feats.view(-1, feat_shape))) ---
    fill_feats = jnp.concatenate(
        [org_feats.astype(jnp.float32),
         gen_feats.reshape(-1, feat_shape).astype(jnp.float32)], axis=0)

    # --- glue: candidate edge list (org edges + generated edges) ---
    # generated edge (i -> n0 + i*num_pred + j) is kept iff j < clip(int(pred_missing[i]),
    # 0, num_pred); dropped / padded edges get -1 endpoints (never match -> free masking).
    deg = jnp.clip(pred_missing.astype(jnp.int32), 0, num_pred)
    i_idx = jnp.arange(n0, dtype=jnp.int32)
    j_idx = jnp.arange(num_pred, dtype=jnp.int32)
    keep = (j_idx[None, :] < deg[:, None]).reshape(-1)
    new_src = jnp.where(keep, jnp.repeat(i_idx, num_pred), -1)
    new_dst = jnp.where(
        keep,
        (n0 + i_idx[:, None] * num_pred + j_idx[None, :]).reshape(-1).astype(jnp.int32),
        -1)

    src = jnp.concatenate([org_edges[:, 0].astype(jnp.int32), new_src])
    dst = jnp.concatenate([org_edges[:, 1].astype(jnp.int32), new_dst])

    n_edges = int(src.shape[0])
    (tm, tn, te, n_pad, e_pad, single_col, edges_resident,
     vmem_limit) = _pick_tiles(n_nodes, n_edges, force_col_tile)

    # Lane-major (1, E_pad) edge layout; padding uses -1 endpoints.
    pad_e = e_pad - n_edges
    src = jnp.pad(src, (0, pad_e), constant_values=-1).reshape(1, e_pad)
    dst = jnp.pad(dst, (0, pad_e), constant_values=-1).reshape(1, e_pad)

    grid = (n_pad // tm, n_pad // tn, e_pad // te)
    if edges_resident:
        edge_spec = pl.BlockSpec((1, e_pad), lambda i, j, k: (0, 0))   # DMA'd once
    else:
        edge_spec = pl.BlockSpec((1, te), lambda i, j, k: (0, k))      # large-E fallback

    kernel = functools.partial(_adj_kernel, te=te,
                               edges_resident=edges_resident, normalize=single_col)

    cost = pl.CostEstimate(
        flops=4 * n_pad * n_pad * e_pad,                  # two MXU matmuls per output elem
        transcendentals=n_pad,                            # row reciprocals
        bytes_accessed=n_pad * n_pad * 4 + 8 * e_pad)

    adj_padded = pl.pallas_call(
        kernel,
        out_shape=jax.ShapeDtypeStruct((n_pad, n_pad), jnp.float32),
        grid_spec=pltpu.PrefetchScalarGridSpec(
            num_scalar_prefetch=0,
            grid=grid,
            in_specs=[edge_spec, edge_spec],
            out_specs=pl.BlockSpec((tm, tn), lambda i, j, k: (i, j)),
            scratch_shapes=[pltpu.VMEM((tm, tn), jnp.float32)]),
        compiler_params=pltpu.CompilerParams(
            dimension_semantics=("parallel", "parallel", "arbitrary"),
            vmem_limit_bytes=vmem_limit),
        cost_estimate=cost,
    )(src, dst)

    adj_blocks = adj_padded[:n_nodes, :n_nodes]
    if single_col:
        adj = adj_blocks                                   # normalized in-kernel
    else:
        # Column-tiled path: kernel emits max(A, A^T) + I; the row normalization is a
        # cheap fused XLA broadcast-multiply (rowsum >= 1 always).
        rowsum = jnp.sum(adj_blocks, axis=1, keepdims=True)
        adj = adj_blocks / rowsum

    # TODO(synk): PyTorch returns adj as torch.sparse_coo_tensor; we return the dense matrix.
    return fill_feats, adj


# ---------------------------- numpy reference ----------------------------
def _ref_forward(org_feats, org_edges, pred_missing, gen_feats, num_pred, feat_shape):
    org_feats = np.asarray(org_feats, np.float32)
    org_edges = np.asarray(org_edges, np.int64)
    deg = np.asarray(pred_missing).astype(np.int32)
    gen = np.asarray(gen_feats, np.float32).reshape(-1, feat_shape)
    n0 = org_feats.shape[0]
    N = n0 + n0 * num_pred
    fill_feats = np.vstack([org_feats, gen])
    edges = [tuple(e) for e in org_edges.tolist()]
    for i in range(n0):
        for j in range(min(num_pred, max(0, int(deg[i])))):
            edges.append((i, n0 + i * num_pred + j))
    A = np.zeros((N, N), np.float32)
    for r, c in edges:
        A[r, c] += 1.0
    S = np.maximum(A, A.T)
    S = S + np.eye(N, dtype=np.float32)
    rowsum = S.sum(1)
    rinv = np.where(rowsum == 0, 0.0, 1.0 / rowsum).astype(np.float32)
    return fill_feats, rinv[:, None] * S


if __name__ == "__main__":
    def run_case(org_node_len, num_pred, feat_shape, n_org_edges, force_col_tile=None):
        key = jax.random.PRNGKey(0)
        k1, k2, k3, k4 = jax.random.split(key, 4)
        org_feats = jax.random.normal(k1, (org_node_len, feat_shape), dtype=jnp.float32)
        gen_feats = jax.random.normal(k2, (org_node_len, num_pred * feat_shape),
                                      dtype=jnp.float32)
        org_edges = jax.random.randint(k3, (n_org_edges, 2), 0, org_node_len,
                                       dtype=jnp.int32)
        pred_missing = jax.random.uniform(k4, (org_node_len,), minval=0.0, maxval=5.0,
                                          dtype=jnp.float32)

        fwd = functools.partial(mend_graph_forward, num_pred=num_pred,
                                feat_shape=feat_shape, force_col_tile=force_col_tile)
        fill_feats, adj = fwd(org_feats, org_edges, pred_missing, gen_feats)
        jax.block_until_ready((fill_feats, adj))

        ref_feats, ref_adj = _ref_forward(org_feats, org_edges, pred_missing, gen_feats,
                                          num_pred, feat_shape)
        np.testing.assert_allclose(np.asarray(fill_feats), ref_feats, rtol=1e-6, atol=1e-6)
        np.testing.assert_allclose(np.asarray(adj), ref_adj, rtol=1e-5, atol=1e-5)

    # MendGraph has no learnable parameters; only structural hyperparameters.
    # Tiny case (matches the module's toy sizes): single row/column block.
    run_case(org_node_len=8, num_pred=3, feat_shape=32, n_org_edges=12)
    # Moderate case: multiple row blocks + multiple edge chunks, single column block
    # (in-kernel row normalization).
    run_case(org_node_len=160, num_pred=3, feat_shape=32, n_org_edges=1200)
    # Same graph, forcing the column-tiled (multi column block) code path.
    run_case(org_node_len=160, num_pred=3, feat_shape=32, n_org_edges=1200,
             force_col_tile=256)

    print("KERNEL_OK")
</pallas_src>

<mosaic_0001>
module attributes {stable_mosaic.version = 11 : i64} {
  func.func @_adj_kernel(%arg0: i32, %arg1: i32, %arg2: i32, %arg3: memref<1x256xi32, #tpu.memory_space<vmem>>, %arg4: memref<1x256xi32, #tpu.memory_space<vmem>>, %arg5: memref<128x128xf32, #tpu.memory_space<vmem>>, %arg6: memref<128x128xf32, #tpu.memory_space<vmem>>) attributes {dimension_semantics = [#tpu.dimension_semantics<parallel>, #tpu.dimension_semantics<parallel>, #tpu.dimension_semantics<arbitrary>], iteration_bounds = array<i64: 1, 1, 1>, scalar_prefetch = 0 : i64, scratch_operands = 1 : i64, tpu.core_type = #tpu.core_type<tc>, window_params = [{pipeline_mode = #tpu.pipeline_mode<synchronous>, transform_indices = @transform_0, window_bounds = array<i64: 1, 256>}, {pipeline_mode = #tpu.pipeline_mode<synchronous>, transform_indices = @transform_1, window_bounds = array<i64: 1, 256>}, {transform_indices = @transform_2, window_bounds = array<i64: 128, 128>}]} {
    %c0_i32 = arith.constant 0 : i32
    %0 = arith.cmpi eq, %arg2, %c0_i32 : i32
    %1 = arith.extui %0 : i1 to i32
    %c0_i32_0 = arith.constant 0 : i32
    %2 = arith.cmpi ne, %1, %c0_i32_0 : i32
    scf.if %2 {
      %cst_14 = arith.constant 0.000000e+00 : f32
      %52 = vector.broadcast %cst_14 : f32 to vector<128x128xf32>
      %c0_15 = arith.constant 0 : index
      %c0_16 = arith.constant 0 : index
      %53 = vector.load %arg5[%c0_15, %c0_16] : memref<128x128xf32, #tpu.memory_space<vmem>>, vector<128x128xf32>
      tpu.vector_store %arg5[%c0_15, %c0_16], %52 {strides = array<i32>} : memref<128x128xf32, #tpu.memory_space<vmem>>, vector<128x128xf32>,
      %cst_17 = arith.constant 0.000000e+00 : f32
      %54 = vector.broadcast %cst_17 : f32 to vector<128x128xf32>
      %c0_18 = arith.constant 0 : index
      %c0_19 = arith.constant 0 : index
      %55 = vector.load %arg6[%c0_18, %c0_19] : memref<128x128xf32, #tpu.memory_space<vmem>>, vector<128x128xf32>
      tpu.vector_store %arg6[%c0_18, %c0_19], %54 {strides = array<i32>} : memref<128x128xf32, #tpu.memory_space<vmem>>, vector<128x128xf32>,
    } else {
    }
    %c256_i32 = arith.constant 256 : i32
    %3 = arith.muli %arg2, %c256_i32 : i32
    %4 = tpu.assume_multiple %3, 256 : i32
    %c0 = arith.constant 0 : index
    %5 = arith.index_cast %4 : i32 to index
    %6 = vector.load %arg3[%c0, %5] : memref<1x256xi32, #tpu.memory_space<vmem>>, vector<1x256xi32>
    %c0_1 = arith.constant 0 : index
    %7 = arith.index_cast %4 : i32 to index
    %8 = vector.load %arg4[%c0_1, %7] : memref<1x256xi32, #tpu.memory_space<vmem>>, vector<1x256xi32>
    %9 = tpu.iota {dimensions = array<i32: 0>} : vector<128x1xi32>
    %c128_i32 = arith.constant 128 : i32
    %10 = arith.muli %arg0, %c128_i32 : i32
    %11 = vector.broadcast %10 : i32 to vector<128x1xi32>
    %12 = arith.addi %9, %11 : vector<128x1xi32>
    %13 = tpu.iota {dimensions = array<i32: 0>} : vector<128x1xi32>
    %c128_i32_2 = arith.constant 128 : i32
    %14 = arith.muli %arg1, %c128_i32_2 : i32
    %15 = vector.broadcast %14 : i32 to vector<128x1xi32>
    %16 = arith.addi %13, %15 : vector<128x1xi32>
    %17 = vector.broadcast %12 : vector<128x1xi32> to vector<128x256xi32>
    %18 = vector.broadcast %6 : vector<1x256xi32> to vector<128x256xi32>
    %19 = arith.cmpi eq, %17, %18 : vector<128x256xi32>
    %20 = arith.extui %19 : vector<128x256xi1> to vector<128x256xi32>
    %21 = arith.sitofp %20 : vector<128x256xi32> to vector<128x256xf32>
    %22 = arith.truncf %21 : vector<128x256xf32> to vector<128x256xbf16>
    %23 = vector.broadcast %12 : vector<128x1xi32> to vector<128x256xi32>
    %24 = vector.broadcast %8 : vector<1x256xi32> to vector<128x256xi32>
    %25 = arith.cmpi eq, %23, %24 : vector<128x256xi32>
    %26 = arith.extui %25 : vector<128x256xi1> to vector<128x256xi32>
    %27 = arith.sitofp %26 : vector<128x256xi32> to vector<128x256xf32>
    %28 = arith.truncf %27 : vector<128x256xf32> to vector<128x256xbf16>
    %29 = vector.broadcast %16 : vector<128x1xi32> to vector<128x256xi32>
    %30 = vector.broadcast %8 : vector<1x256xi32> to vector<128x256xi32>
    %31 = arith.cmpi eq, %29, %30 : vector<128x256xi32>
    %32 = arith.extui %31 : vector<128x256xi1> to vector<128x256xi32>
    %33 = arith.sitofp %32 : vector<128x256xi32> to vector<128x256xf32>
    %34 = arith.truncf %33 : vector<128x256xf32> to vector<128x256xbf16>
    %35 = vector.broadcast %16 : vector<128x1xi32> to vector<128x256xi32>
    %36 = vector.broadcast %6 : vector<1x256xi32> to vector<128x256xi32>
    %37 = arith.cmpi eq, %35, %36 : vector<128x256xi32>
    %38 = arith.extui %37 : vector<128x256xi1> to vector<128x256xi32>
    %39 = arith.sitofp %38 : vector<128x256xi32> to vector<128x256xf32>
    %40 = arith.truncf %39 : vector<128x256xf32> to vector<128x256xbf16>
    %c0_3 = arith.constant 0 : index
    %c0_4 = arith.constant 0 : index
    %41 = vector.load %arg5[%c0_3, %c0_4] : memref<128x128xf32, #tpu.memory_space<vmem>>, vector<128x128xf32>
    %cst = arith.constant dense<0.000000e+00> : vector<128x128xf32>
    %42 = tpu.matmul %22, %34, %cst {dimension_numbers = #tpu.dot_dimension_numbers<[1], [1], [0], [0], [0, 0, 1, 0], [], []>} : vector<128x256xbf16>, vector<128x256xbf16>, vector<128x128xf32> -> vector<128x128xf32>
    %43 = arith.addf %41, %42 : vector<128x128xf32>
    %c0_5 = arith.constant 0 : index
    %c0_6 = arith.constant 0 : index
    %44 = vector.load %arg5[%c0_5, %c0_6] : memref<128x128xf32, #tpu.memory_space<vmem>>, vector<128x128xf32>
    tpu.vector_store %arg5[%c0_5, %c0_6], %43 {strides = array<i32>} : memref<128x128xf32, #tpu.memory_space<vmem>>, vector<128x128xf32>,
    %c0_7 = arith.constant 0 : index
    %c0_8 = arith.constant 0 : index
    %45 = vector.load %arg6[%c0_7, %c0_8] : memref<128x128xf32, #tpu.memory_space<vmem>>, vector<128x128xf32>
    %cst_9 = arith.constant dense<0.000000e+00> : vector<128x128xf32>
    %46 = tpu.matmul %28, %40, %cst_9 {dimension_numbers = #tpu.dot_dimension_numbers<[1], [1], [0], [0], [0, 0, 1, 0], [], []>} : vector<128x256xbf16>, vector<128x256xbf16>, vector<128x128xf32> -> vector<128x128xf32>
    %47 = arith.addf %45, %46 : vector<128x128xf32>
    %c0_10 = arith.constant 0 : index
    %c0_11 = arith.constant 0 : index
    %48 = vector.load %arg6[%c0_10, %c0_11] : memref<128x128xf32, #tpu.memory_space<vmem>>, vector<128x128xf32>
    tpu.vector_store %arg6[%c0_10, %c0_11], %47 {strides = array<i32>} : memref<128x128xf32, #tpu.memory_space<vmem>>, vector<128x128xf32>,
    %c0_i32_12 = arith.constant 0 : i32
    %49 = arith.cmpi eq, %arg2, %c0_i32_12 : i32
    %50 = arith.extui %49 : i1 to i32
    %c0_i32_13 = arith.constant 0 : i32
    %51 = arith.cmpi ne, %50, %c0_i32_13 : i32
    scf.if %51 {
      %c0_14 = arith.constant 0 : index
      %c0_15 = arith.constant 0 : index
      %52 = vector.load %arg5[%c0_14, %c0_15] : memref<128x128xf32, #tpu.memory_space<vmem>>, vector<128x128xf32>
      %c0_16 = arith.constant 0 : index
      %c0_17 = arith.constant 0 : index
      %53 = vector.load %arg6[%c0_16, %c0_17] : memref<128x128xf32, #tpu.memory_space<vmem>>, vector<128x128xf32>
      %54 = arith.maximumf %52, %53 : vector<128x128xf32>
      %55 = tpu.iota {dimensions = array<i32: 0>} : vector<128x1xi32>
      %c128_i32_18 = arith.constant 128 : i32
      %56 = arith.muli %arg0, %c128_i32_18 : i32
      %57 = vector.broadcast %56 : i32 to vector<128x1xi32>
      %58 = arith.addi %55, %57 : vector<128x1xi32>
      %59 = tpu.iota {dimensions = array<i32: 1>} : vector<1x128xi32>
      %c128_i32_19 = arith.constant 128 : i32
      %60 = arith.muli %arg1, %c128_i32_19 : i32
      %61 = vector.broadcast %60 : i32 to vector<1x128xi32>
      %62 = arith.addi %59, %61 : vector<1x128xi32>
      %63 = vector.broadcast %58 : vector<128x1xi32> to vector<128x128xi32>
      %64 = vector.broadcast %62 : vector<1x128xi32> to vector<128x128xi32>
      %65 = arith.cmpi eq, %63, %64 : vector<128x128xi32>
      %66 = arith.extui %65 : vector<128x128xi1> to vector<128x128xi32>
      %67 = arith.sitofp %66 : vector<128x128xi32> to vector<128x128xf32>
      %68 = arith.addf %54, %67 : vector<128x128xf32>
      %cst_20 = arith.constant dense<0.000000e+00> : vector<128xf32>
      %69 = vector.multi_reduction <add>, %68, %cst_20 [1] : vector<128x128xf32> to vector<128xf32>
      %70 = vector.shape_cast %69 : vector<128xf32> to vector<128x1xf32>
      %71 = tpu.reciprocal %70 {approx = true} : vector<128x1xf32> -> vector<128x1xf32>
      %72 = arith.mulf %70, %71 : vector<128x1xf32>
      %cst_21 = arith.constant 2.000000e+00 : f32
      %73 = vector.broadcast %cst_21 : f32 to vector<128x1xf32>
      %74 = arith.subf %73, %72 : vector<128x1xf32>
      %75 = arith.mulf %71, %74 : vector<128x1xf32>
      %76 = arith.mulf %70, %75 : vector<128x1xf32>
      %cst_22 = arith.constant 2.000000e+00 : f32
      %77 = vector.broadcast %cst_22 : f32 to vector<128x1xf32>
      %78 = arith.subf %77, %76 : vector<128x1xf32>
      %79 = arith.mulf %75, %78 : vector<128x1xf32>
      %80 = vector.broadcast %79 : vector<128x1xf32> to vector<128x128xf32>
      %81 = arith.mulf %68, %80 : vector<128x128xf32>
      %c0_23 = arith.constant 0 : index
      %c0_24 = arith.constant 0 : index
      %82 = vector.load %arg5[%c0_23, %c0_24] : memref<128x128xf32, #tpu.memory_space<vmem>>, vector<128x128xf32>
      tpu.vector_store %arg5[%c0_23, %c0_24], %81 {strides = array<i32>} : memref<128x128xf32, #tpu.memory_space<vmem>>, vector<128x128xf32>,
    } else {
    }
    return
  }
  func.func @transform_0(%arg0: i32, %arg1: i32, %arg2: i32) -> (i32, i32) {
    %c0_i32 = arith.constant 0 : i32
    %c0_i32_0 = arith.constant 0 : i32
    %c0_i32_1 = arith.constant 0 : i32
    return %c0_i32, %c0_i32_0 : i32, i32
  }
  func.func @transform_1(%arg0: i32, %arg1: i32, %arg2: i32) -> (i32, i32) {
    %c0_i32 = arith.constant 0 : i32
    %c0_i32_0 = arith.constant 0 : i32
    %c0_i32_1 = arith.constant 0 : i32
    return %c0_i32, %c0_i32_0 : i32, i32
  }
  func.func @transform_2(%arg0: i32, %arg1: i32, %arg2: i32) -> (i32, i32) {
    %c0_i32 = arith.constant 0 : i32
    return %arg0, %arg1 : i32, i32
  }
}

</mosaic_0001>

<llo_original>
// kernel: tpu_custom_call.1
$region0: #{tpu_custom_call.1}
  #allocation0 [shape = 'u32[]', space=smem, size = 0x4, offset = 0x4, fixed_abs, tag = 'smem constant byte address 0x4 - core index']
  #allocation1 [shape = 'u32[144,128]{1,0:T(1,128)}', space=vmem, size = 0x12000, scoped, tag = 'internal scratch']
  #allocation2 [shape = 'f32[128,128]{1,0:T(8,128)}', space=vmem, size = 0x10000, scoped, tag = 'scratch operand']
  %s0 = inlined_call_operand.hbm [shape: s32[1,256], index: 0, kind: input, shape index: {}]
  %s1 = inlined_call_operand.hbm [shape: s32[1,256], index: 1, kind: input, shape index: {}]
  %s2 = inlined_call_operand.hbm [shape: f32[128,128], index: 2, kind: output, shape index: {}]
  %s3 = sld [smem:[#allocation0]]
  $region34: #{tpu_custom_call.1} parent=0
    _
  %s5 = ssub.s32 1, %s3
  %s6 = scalar_select 0, %s5, %s3
  $region1: #{tpu_custom_call.1} parent=0
    #allocation3 [shape = 'u8[1024]{0}', space=vmem, size = 0x400, scoped, tag = 'input window, operand 0, single buffered']
    #allocation4 [shape = 's32[1]{0}', space=sflag, size = 0x4, scoped, tag = 'scoped memory for tpu_custom_call.1']
    #allocation5 [shape = 's32[1]{0}', space=sflag, size = 0x4, scoped, tag = 'scoped memory for tpu_custom_call.1']
    #allocation6 [shape = 'u8[1024]{0}', space=vmem, size = 0x400, scoped, tag = 'input window, operand 1, single buffered']
    #allocation7 [shape = 's32[1]{0}', space=sflag, size = 0x4, scoped, tag = 'scoped memory for tpu_custom_call.1']
    #allocation8 [shape = 'u8[65536]{0}', space=vmem, size = 0x10000, scoped, tag = 'output window, operand 0, single buffered']
    %7 = vsyncpa [#allocation4], 0
    %8 = vsyncpa [#allocation7], 0
    %9 = vsyncpa [#allocation5], 0
    // Predicated region
    $region2: #{tpu_custom_call.1} parent=1 // pred_check
      _
    $region3: #{tpu_custom_call.1} parent=1 // pred_check_branch
      %11 = sbr.rel (0) target = $region5
    $region4: #{tpu_custom_call.1} parent=1 // pred_region
      %s13 = ssub.s32 32, 32
      %14 = vsyncadd [#allocation4], %s13
      %s16 = sshll.u32 [#allocation3], 4
      %s17 = int_to_ptr.vmem [resolvable:$true] %s16
      %19 = dma.hbm_to_vmem [thread:$0]  %s0, 32, %s17, [#allocation4]
    $region5: #{tpu_custom_call.1} parent=1 // pred_fallthru
      _
    // Predicated region
    $region6: #{tpu_custom_call.1} parent=1 // pred_check
      _
    $region7: #{tpu_custom_call.1} parent=1 // pred_check_branch
      %21 = sbr.rel (0) target = $region9
    $region8: #{tpu_custom_call.1} parent=1 // pred_region
      %s23 = ssub.s32 32, 32
      %24 = vsyncadd [#allocation7], %s23
      %s26 = sshll.u32 [#allocation6], 4
      %s27 = int_to_ptr.vmem [resolvable:$true] %s26
      %29 = dma.hbm_to_vmem [thread:$0]  %s1, 32, %s27, [#allocation7]
    $region9: #{tpu_custom_call.1} parent=1 // pred_fallthru
      _
    // Predicated region
    $region10: #{tpu_custom_call.1} parent=1 // pred_check
      _
    $region11: #{tpu_custom_call.1} parent=1 // pred_check_branch
      %31 = sbr.rel (0) target = $region13
    $region12: #{tpu_custom_call.1} parent=1 // pred_region
      %32 = dma.done [#allocation4], 32
    $region13: #{tpu_custom_call.1} parent=1 // pred_fallthru
      _
    // Predicated region
    $region14: #{tpu_custom_call.1} parent=1 // pred_check
      _
    $region15: #{tpu_custom_call.1} parent=1 // pred_check_branch
      %34 = sbr.rel (0) target = $region17
    $region16: #{tpu_custom_call.1} parent=1 // pred_region
      %35 = dma.done [#allocation7], 32
    $region17: #{tpu_custom_call.1} parent=1 // pred_fallthru
      _
    %p37 = scmp.eq.s32.totalorder 0, 0
    // Predicated region
    $region18: #{tpu_custom_call.1} parent=1 // pred_check
      %p38 = pneg %p37
    $region19: #{tpu_custom_call.1} parent=1 // pred_check_branch
      %40 = sbr.rel (%p38) target = $region21
    $region20: #{tpu_custom_call.1} parent=1 // pred_region
      %41 = vst [vmem:[#allocation8] sm:$0xff] 0.0
      %42 = vst [vmem:[#allocation8 + $0x8] sm:$0xff] 0.0
      %43 = vst [vmem:[#allocation8 + $0x10] sm:$0xff] 0.0
      %44 = vst [vmem:[#allocation8 + $0x18] sm:$0xff] 0.0
      %45 = vst [vmem:[#allocation8 + $0x20] sm:$0xff] 0.0
      %46 = vst [vmem:[#allocation8 + $0x28] sm:$0xff] 0.0
      %47 = vst [vmem:[#allocation8 + $0x30] sm:$0xff] 0.0
      %48 = vst [vmem:[#allocation8 + $0x38] sm:$0xff] 0.0
      %49 = vst [vmem:[#allocation8 + $0x40] sm:$0xff] 0.0
      %50 = vst [vmem:[#allocation8 + $0x48] sm:$0xff] 0.0
      %51 = vst [vmem:[#allocation8 + $0x50] sm:$0xff] 0.0
      %52 = vst [vmem:[#allocation8 + $0x58] sm:$0xff] 0.0
      %53 = vst [vmem:[#allocation8 + $0x60] sm:$0xff] 0.0
      %54 = vst [vmem:[#allocation8 + $0x68] sm:$0xff] 0.0
      %55 = vst [vmem:[#allocation8 + $0x70] sm:$0xff] 0.0
      %56 = vst [vmem:[#allocation8 + $0x78] sm:$0xff] 0.0
      %57 = vst [vmem:[#allocation2] sm:$0xff] 0.0
      %58 = vst [vmem:[#allocation2 + $0x8] sm:$0xff] 0.0
      %59 = vst [vmem:[#allocation2 + $0x10] sm:$0xff] 0.0
      %60 = vst [vmem:[#allocation2 + $0x18] sm:$0xff] 0.0
      %61 = vst [vmem:[#allocation2 + $0x20] sm:$0xff] 0.0
      %62 = vst [vmem:[#allocation2 + $0x28] sm:$0xff] 0.0
      %63 = vst [vmem:[#allocation2 + $0x30] sm:$0xff] 0.0
      %64 = vst [vmem:[#allocation2 + $0x38] sm:$0xff] 0.0
      %65 = vst [vmem:[#allocation2 + $0x40] sm:$0xff] 0.0
      %66 = vst [vmem:[#allocation2 + $0x48] sm:$0xff] 0.0
      %67 = vst [vmem:[#allocation2 + $0x50] sm:$0xff] 0.0
      %68 = vst [vmem:[#allocation2 + $0x58] sm:$0xff] 0.0
      %69 = vst [vmem:[#allocation2 + $0x60] sm:$0xff] 0.0
      %70 = vst [vmem:[#allocation2 + $0x68] sm:$0xff] 0.0
      %71 = vst [vmem:[#allocation2 + $0x70] sm:$0xff] 0.0
      %72 = vst [vmem:[#allocation2 + $0x78] sm:$0xff] 0.0
    $region21: #{tpu_custom_call.1} parent=1 // pred_fallthru
      _
    %s73 = smul.u32 0, 256
    %s74 = sshra.s32 %s73, 7
    %s75 = sand.u32 %s73, 127
    %s76 = scalar_lea.vmem [#allocation3], %s74
    %v77 = vld [vmem:[%s76] sm:$0x3]
    %s78 = scalar_lea.vmem [#allocation6], %s74
    %v79 = vld [vmem:[%s78] sm:$0x3]
    %v80 = vlaneseq
    %v81 = vshrl.u32 %v80, 7
    %v82 = vadd.s32 %v81, 8
    %v83 = vadd.s32 %v81, 16
    %v84 = vadd.s32 %v81, 24
    %v85 = vadd.s32 %v81, 32
    %v86 = vadd.s32 %v81, 40
    %v87 = vadd.s32 %v81, 48
    %v88 = vadd.s32 %v81, 56
    %v89 = vadd.s32 %v81, 64
    %v90 = vadd.s32 %v81, 72
    %v91 = vadd.s32 %v81, 80
    %v92 = vadd.s32 %v81, 88
    %v93 = vadd.s32 %v81, 96
    %v94 = vadd.s32 %v81, 104
    %v95 = vadd.s32 %v81, 112
    %v96 = vadd.s32 %v81, 120
    %s97 = smul.u32 0, 128
    %v98 = vstv %s97
    %v99 = vadd.s32 %v81, %v98
    %v100 = vadd.s32 %v82, %v98
    %v101 = vadd.s32 %v83, %v98
    %v102 = vadd.s32 %v84, %v98
    %v103 = vadd.s32 %v85, %v98
    %v104 = vadd.s32 %v86, %v98
    %v105 = vadd.s32 %v87, %v98
    %v106 = vadd.s32 %v88, %v98
    %v107 = vadd.s32 %v89, %v98
    %v108 = vadd.s32 %v90, %v98
    %v109 = vadd.s32 %v91, %v98
    %v110 = vadd.s32 %v92, %v98
    %v111 = vadd.s32 %v93, %v98
    %v112 = vadd.s32 %v94, %v98
    %v113 = vadd.s32 %v95, %v98
    %v114 = vadd.s32 %v96, %v98
    %s115 = smul.u32 0, 128
    %v116 = vstv %s115
    %v117 = vadd.s32 %v81, %v116
    %v118 = vadd.s32 %v82, %v116
    %v119 = vadd.s32 %v83, %v116
    %v120 = vadd.s32 %v84, %v116
    %v121 = vadd.s32 %v85, %v116
    %v122 = vadd.s32 %v86, %v116
    %v123 = vadd.s32 %v87, %v116
    %v124 = vadd.s32 %v88, %v116
    %v125 = vadd.s32 %v89, %v116
    %v126 = vadd.s32 %v90, %v116
    %v127 = vadd.s32 %v91, %v116
    %v128 = vadd.s32 %v92, %v116
    %v129 = vadd.s32 %v93, %v116
    %v130 = vadd.s32 %v94, %v116
    %v131 = vadd.s32 %v95, %v116
    %v132 = vadd.s32 %v96, %v116
    %v133 = vlaneseq
    %v134 = vshrl.u32 %v133, 7
    %v135 = vsub.s32 0, %v134
    %v136 = vrot.slane %v77, %v135
    %v137 = vlaneseq
    %v138 = vshrl.u32 %v137, 7
    %v139 = vsub.s32 1, %v138
    %v140 = vrot.slane %v77, %v139
    %vm141 = vcmp.eq.s32.totalorder %v99, %v136
    %vm142 = vcmp.eq.s32.totalorder %v99, %v140
    %vm143 = vcmp.eq.s32.totalorder %v100, %v136
    %vm144 = vcmp.eq.s32.totalorder %v100, %v140
    %vm145 = vcmp.eq.s32.totalorder %v101, %v136
    %vm146 = vcmp.eq.s32.totalorder %v101, %v140
    %vm147 = vcmp.eq.s32.totalorder %v102, %v136
    %vm148 = vcmp.eq.s32.totalorder %v102, %v140
    %vm149 = vcmp.eq.s32.totalorder %v103, %v136
    %vm150 = vcmp.eq.s32.totalorder %v103, %v140
    %vm151 = vcmp.eq.s32.totalorder %v104, %v136
    %vm152 = vcmp.eq.s32.totalorder %v104, %v140
    %vm153 = vcmp.eq.s32.totalorder %v105, %v136
    %vm154 = vcmp.eq.s32.totalorder %v105, %v140
    %vm155 = vcmp.eq.s32.totalorder %v106, %v136
    %vm156 = vcmp.eq.s32.totalorder %v106, %v140
    %vm157 = vcmp.eq.s32.totalorder %v107, %v136
    %vm158 = vcmp.eq.s32.totalorder %v107, %v140
    %vm159 = vcmp.eq.s32.totalorder %v108, %v136
    %vm160 = vcmp.eq.s32.totalorder %v108, %v140
    %vm161 = vcmp.eq.s32.totalorder %v109, %v136
    %vm162 = vcmp.eq.s32.totalorder %v109, %v140
    %vm163 = vcmp.eq.s32.totalorder %v110, %v136
    %vm164 = vcmp.eq.s32.totalorder %v110, %v140
    %vm165 = vcmp.eq.s32.totalorder %v111, %v136
    %vm166 = vcmp.eq.s32.totalorder %v111, %v140
    %vm167 = vcmp.eq.s32.totalorder %v112, %v136
    %vm168 = vcmp.eq.s32.totalorder %v112, %v140
    %vm169 = vcmp.eq.s32.totalorder %v113, %v136
    %vm170 = vcmp.eq.s32.totalorder %v113, %v140
    %vm171 = vcmp.eq.s32.totalorder %v114, %v136
    %vm172 = vcmp.eq.s32.totalorder %v114, %v140
    %v173 = vsel %vm141, 1, 0
    %v174 = vsel %vm142, 1, 0
    %v175 = vsel %vm143, 1, 0
    %v176 = vsel %vm144, 1, 0
    %v177 = vsel %vm145, 1, 0
    %v178 = vsel %vm146, 1, 0
    %v179 = vsel %vm147, 1, 0
    %v180 = vsel %vm148, 1, 0
    %v181 = vsel %vm149, 1, 0
    %v182 = vsel %vm150, 1, 0
    %v183 = vsel %vm151, 1, 0
    %v184 = vsel %vm152, 1, 0
    %v185 = vsel %vm153, 1, 0
    %v186 = vsel %vm154, 1, 0
    %v187 = vsel %vm155, 1, 0
    %v188 = vsel %vm156, 1, 0
    %v189 = vsel %vm157, 1, 0
    %v190 = vsel %vm158, 1, 0
    %v191 = vsel %vm159, 1, 0
    %v192 = vsel %vm160, 1, 0
    %v193 = vsel %vm161, 1, 0
    %v194 = vsel %vm162, 1, 0
    %v195 = vsel %vm163, 1, 0
    %v196 = vsel %vm164, 1, 0
    %v197 = vsel %vm165, 1, 0
    %v198 = vsel %vm166, 1, 0
    %v199 = vsel %vm167, 1, 0
    %v200 = vsel %vm168, 1, 0
    %v201 = vsel %vm169, 1, 0
    %v202 = vsel %vm170, 1, 0
    %v203 = vsel %vm171, 1, 0
    %v204 = vsel %vm172, 1, 0
    %v205 = vcvt.s32.f32 %v173
    %v206 = vcvt.s32.f32 %v174
    %v207 = vcvt.s32.f32 %v175
    %v208 = vcvt.s32.f32 %v176
    %v209 = vcvt.s32.f32 %v177
    %v210 = vcvt.s32.f32 %v178
    %v211 = vcvt.s32.f32 %v179
    %v212 = vcvt.s32.f32 %v180
    %v213 = vcvt.s32.f32 %v181
    %v214 = vcvt.s32.f32 %v182
    %v215 = vcvt.s32.f32 %v183
    %v216 = vcvt.s32.f32 %v184
    %v217 = vcvt.s32.f32 %v185
    %v218 = vcvt.s32.f32 %v186
    %v219 = vcvt.s32.f32 %v187
    %v220 = vcvt.s32.f32 %v188
    %v221 = vcvt.s32.f32 %v189
    %v222 = vcvt.s32.f32 %v190
    %v223 = vcvt.s32.f32 %v191
    %v224 = vcvt.s32.f32 %v192
    %v225 = vcvt.s32.f32 %v193
    %v226 = vcvt.s32.f32 %v194
    %v227 = vcvt.s32.f32 %v195
    %v228 = vcvt.s32.f32 %v196
    %v229 = vcvt.s32.f32 %v197
    %v230 = vcvt.s32.f32 %v198
    %v231 = vcvt.s32.f32 %v199
    %v232 = vcvt.s32.f32 %v200
    %v233 = vcvt.s32.f32 %v201
    %v234 = vcvt.s32.f32 %v202
    %v235 = vcvt.s32.f32 %v203
    %v236 = vcvt.s32.f32 %v204
    %v237 = vpack.c.bf16 %v207, %v205
    %v238 = vpack.c.bf16 %v208, %v206
    %v239 = vpack.c.bf16 %v211, %v209
    %v240 = vpack.c.bf16 %v212, %v210
    %v241 = vpack.c.bf16 %v215, %v213
    %v242 = vpack.c.bf16 %v216, %v214
    %v243 = vpack.c.bf16 %v219, %v217
    %v244 = vpack.c.bf16 %v220, %v218
    %v245 = vpack.c.bf16 %v223, %v221
    %v246 = vpack.c.bf16 %v224, %v222
    %v247 = vpack.c.bf16 %v227, %v225
    %v248 = vpack.c.bf16 %v228, %v226
    %v249 = vpack.c.bf16 %v231, %v229
    %v250 = vpack.c.bf16 %v232, %v230
    %v251 = vpack.c.bf16 %v235, %v233
    %v252 = vpack.c.bf16 %v236, %v234
    %v253 = vlaneseq
    %v254 = vshrl.u32 %v253, 7
    %v255 = vsub.s32 0, %v254
    %v256 = vrot.slane %v79, %v255
    %v257 = vlaneseq
    %v258 = vshrl.u32 %v257, 7
    %v259 = vsub.s32 1, %v258
    %v260 = vrot.slane %v79, %v259
    %vm261 = vcmp.eq.s32.totalorder %v99, %v256
    %vm262 = vcmp.eq.s32.totalorder %v99, %v260
    %vm263 = vcmp.eq.s32.totalorder %v100, %v256
    %vm264 = vcmp.eq.s32.totalorder %v100, %v260
    %vm265 = vcmp.eq.s32.totalorder %v101, %v256
    %vm266 = vcmp.eq.s32.totalorder %v101, %v260
    %vm267 = vcmp.eq.s32.totalorder %v102, %v256
    %vm268 = vcmp.eq.s32.totalorder %v102, %v260
    %vm269 = vcmp.eq.s32.totalorder %v103, %v256
    %vm270 = vcmp.eq.s32.totalorder %v103, %v260
    %vm271 = vcmp.eq.s32.totalorder %v104, %v256
    %vm272 = vcmp.eq.s32.totalorder %v104, %v260
    %vm273 = vcmp.eq.s32.totalorder %v105, %v256
    %vm274 = vcmp.eq.s32.totalorder %v105, %v260
    %vm275 = vcmp.eq.s32.totalorder %v106, %v256
    %vm276 = vcmp.eq.s32.totalorder %v106, %v260
    %vm277 = vcmp.eq.s32.totalorder %v107, %v256
    %vm278 = vcmp.eq.s32.totalorder %v107, %v260
    %vm279 = vcmp.eq.s32.totalorder %v108, %v256
    %vm280 = vcmp.eq.s32.totalorder %v108, %v260
    %vm281 = vcmp.eq.s32.totalorder %v109, %v256
    %vm282 = vcmp.eq.s32.totalorder %v109, %v260
    %vm283 = vcmp.eq.s32.totalorder %v110, %v256
    %vm284 = vcmp.eq.s32.totalorder %v110, %v260
    %vm285 = vcmp.eq.s32.totalorder %v111, %v256
    %vm286 = vcmp.eq.s32.totalorder %v111, %v260
    %vm287 = vcmp.eq.s32.totalorder %v112, %v256
    %vm288 = vcmp.eq.s32.totalorder %v112, %v260
    %vm289 = vcmp.eq.s32.totalorder %v113, %v256
    %vm290 = vcmp.eq.s32.totalorder %v113, %v260
    %vm291 = vcmp.eq.s32.totalorder %v114, %v256
    %vm292 = vcmp.eq.s32.totalorder %v114, %v260
    %v293 = vsel %vm261, 1, 0
    %v294 = vsel %vm262, 1, 0
    %v295 = vsel %vm263, 1, 0
    %v296 = vsel %vm264, 1, 0
    %v297 = vsel %vm265, 1, 0
    %v298 = vsel %vm266, 1, 0
    %v299 = vsel %vm267, 1, 0
    %v300 = vsel %vm268, 1, 0
    %v301 = vsel %vm269, 1, 0
    %v302 = vsel %vm270, 1, 0
    %v303 = vsel %vm271, 1, 0
    %v304 = vsel %vm272, 1, 0
    %v305 = vsel %vm273, 1, 0
    %v306 = vsel %vm274, 1, 0
    %v307 = vsel %vm275, 1, 0
    %v308 = vsel %vm276, 1, 0
    %v309 = vsel %vm277, 1, 0
    %v310 = vsel %vm278, 1, 0
    %v311 = vsel %vm279, 1, 0
    %v312 = vsel %vm280, 1, 0
    %v313 = vsel %vm281, 1, 0
    %v314 = vsel %vm282, 1, 0
    %v315 = vsel %vm283, 1, 0
    %v316 = vsel %vm284, 1, 0
    %v317 = vsel %vm285, 1, 0
    %v318 = vsel %vm286, 1, 0
    %v319 = vsel %vm287, 1, 0
    %v320 = vsel %vm288, 1, 0
    %v321 = vsel %vm289, 1, 0
    %v322 = vsel %vm290, 1, 0
    %v323 = vsel %vm291, 1, 0
    %v324 = vsel %vm292, 1, 0
    %v325 = vcvt.s32.f32 %v293
    %v326 = vcvt.s32.f32 %v294
    %v327 = vcvt.s32.f32 %v295
    %v328 = vcvt.s32.f32 %v296
    %v329 = vcvt.s32.f32 %v297
    %v330 = vcvt.s32.f32 %v298
    %v331 = vcvt.s32.f32 %v299
    %v332 = vcvt.s32.f32 %v300
    %v333 = vcvt.s32.f32 %v301
    %v334 = vcvt.s32.f32 %v302
    %v335 = vcvt.s32.f32 %v303
    %v336 = vcvt.s32.f32 %v304
    %v337 = vcvt.s32.f32 %v305
    %v338 = vcvt.s32.f32 %v306
    %v339 = vcvt.s32.f32 %v307
    %v340 = vcvt.s32.f32 %v308
    %v341 = vcvt.s32.f32 %v309
    %v342 = vcvt.s32.f32 %v310
    %v343 = vcvt.s32.f32 %v311
    %v344 = vcvt.s32.f32 %v312
    %v345 = vcvt.s32.f32 %v313
    %v346 = vcvt.s32.f32 %v314
    %v347 = vcvt.s32.f32 %v315
    %v348 = vcvt.s32.f32 %v316
    %v349 = vcvt.s32.f32 %v317
    %v350 = vcvt.s32.f32 %v318
    %v351 = vcvt.s32.f32 %v319
    %v352 = vcvt.s32.f32 %v320
    %v353 = vcvt.s32.f32 %v321
    %v354 = vcvt.s32.f32 %v322
    %v355 = vcvt.s32.f32 %v323
    %v356 = vcvt.s32.f32 %v324
    %v357 = vpack.c.bf16 %v327, %v325
    %v358 = vpack.c.bf16 %v328, %v326
    %v359 = vpack.c.bf16 %v331, %v329
    %v360 = vpack.c.bf16 %v332, %v330
    %v361 = vpack.c.bf16 %v335, %v333
    %v362 = vpack.c.bf16 %v336, %v334
    %v363 = vpack.c.bf16 %v339, %v337
    %v364 = vpack.c.bf16 %v340, %v338
    %v365 = vpack.c.bf16 %v343, %v341
    %v366 = vpack.c.bf16 %v344, %v342
    %v367 = vpack.c.bf16 %v347, %v345
    %v368 = vpack.c.bf16 %v348, %v346
    %v369 = vpack.c.bf16 %v351, %v349
    %v370 = vpack.c.bf16 %v352, %v350
    %v371 = vpack.c.bf16 %v355, %v353
    %v372 = vpack.c.bf16 %v356, %v354
    %vm373 = vcmp.eq.s32.totalorder %v117, %v256
    %vm374 = vcmp.eq.s32.totalorder %v117, %v260
    %vm375 = vcmp.eq.s32.totalorder %v118, %v256
    %vm376 = vcmp.eq.s32.totalorder %v118, %v260
    %vm377 = vcmp.eq.s32.totalorder %v119, %v256
    %vm378 = vcmp.eq.s32.totalorder %v119, %v260
    %vm379 = vcmp.eq.s32.totalorder %v120, %v256
    %vm380 = vcmp.eq.s32.totalorder %v120, %v260
    %vm381 = vcmp.eq.s32.totalorder %v121, %v256
    %vm382 = vcmp.eq.s32.totalorder %v121, %v260
    %vm383 = vcmp.eq.s32.totalorder %v122, %v256
    %vm384 = vcmp.eq.s32.totalorder %v122, %v260
    %vm385 = vcmp.eq.s32.totalorder %v123, %v256
    %vm386 = vcmp.eq.s32.totalorder %v123, %v260
    %vm387 = vcmp.eq.s32.totalorder %v124, %v256
    %vm388 = vcmp.eq.s32.totalorder %v124, %v260
    %vm389 = vcmp.eq.s32.totalorder %v125, %v256
    %vm390 = vcmp.eq.s32.totalorder %v125, %v260
    %vm391 = vcmp.eq.s32.totalorder %v126, %v256
    %vm392 = vcmp.eq.s32.totalorder %v126, %v260
    %vm393 = vcmp.eq.s32.totalorder %v127, %v256
    %vm394 = vcmp.eq.s32.totalorder %v127, %v260
    %vm395 = vcmp.eq.s32.totalorder %v128, %v256
    %vm396 = vcmp.eq.s32.totalorder %v128, %v260
    %vm397 = vcmp.eq.s32.totalorder %v129, %v256
    %vm398 = vcmp.eq.s32.totalorder %v129, %v260
    %vm399 = vcmp.eq.s32.totalorder %v130, %v256
    %vm400 = vcmp.eq.s32.totalorder %v130, %v260
    %vm401 = vcmp.eq.s32.totalorder %v131, %v256
    %vm402 = vcmp.eq.s32.totalorder %v131, %v260
    %vm403 = vcmp.eq.s32.totalorder %v132, %v256
    %vm404 = vcmp.eq.s32.totalorder %v132, %v260
    %v405 = vsel %vm373, 1, 0
    %v406 = vsel %vm374, 1, 0
    %v407 = vsel %vm375, 1, 0
    %v408 = vsel %vm376, 1, 0
    %v409 = vsel %vm377, 1, 0
    %v410 = vsel %vm378, 1, 0
    %v411 = vsel %vm379, 1, 0
    %v412 = vsel %vm380, 1, 0
    %v413 = vsel %vm381, 1, 0
    %v414 = vsel %vm382, 1, 0
    %v415 = vsel %vm383, 1, 0
    %v416 = vsel %vm384, 1, 0
    %v417 = vsel %vm385, 1, 0
    %v418 = vsel %vm386, 1, 0
    %v419 = vsel %vm387, 1, 0
    %v420 = vsel %vm388, 1, 0
    %v421 = vsel %vm389, 1, 0
    %v422 = vsel %vm390, 1, 0
    %v423 = vsel %vm391, 1, 0
    %v424 = vsel %vm392, 1, 0
    %v425 = vsel %vm393, 1, 0
    %v426 = vsel %vm394, 1, 0
    %v427 = vsel %vm395, 1, 0
    %v428 = vsel %vm396, 1, 0
    %v429 = vsel %vm397, 1, 0
    %v430 = vsel %vm398, 1, 0
    %v431 = vsel %vm399, 1, 0
    %v432 = vsel %vm400, 1, 0
    %v433 = vsel %vm401, 1, 0
    %v434 = vsel %vm402, 1, 0
    %v435 = vsel %vm403, 1, 0
    %v436 = vsel %vm404, 1, 0
    %v437 = vcvt.s32.f32 %v405
    %v438 = vcvt.s32.f32 %v406
    %v439 = vcvt.s32.f32 %v407
    %v440 = vcvt.s32.f32 %v408
    %v441 = vcvt.s32.f32 %v409
    %v442 = vcvt.s32.f32 %v410
    %v443 = vcvt.s32.f32 %v411
    %v444 = vcvt.s32.f32 %v412
    %v445 = vcvt.s32.f32 %v413
    %v446 = vcvt.s32.f32 %v414
    %v447 = vcvt.s32.f32 %v415
    %v448 = vcvt.s32.f32 %v416
    %v449 = vcvt.s32.f32 %v417
    %v450 = vcvt.s32.f32 %v418
    %v451 = vcvt.s32.f32 %v419
    %v452 = vcvt.s32.f32 %v420
    %v453 = vcvt.s32.f32 %v421
    %v454 = vcvt.s32.f32 %v422
    %v455 = vcvt.s32.f32 %v423
    %v456 = vcvt.s32.f32 %v424
    %v457 = vcvt.s32.f32 %v425
    %v458 = vcvt.s32.f32 %v426
    %v459 = vcvt.s32.f32 %v427
    %v460 = vcvt.s32.f32 %v428
    %v461 = vcvt.s32.f32 %v429
    %v462 = vcvt.s32.f32 %v430
    %v463 = vcvt.s32.f32 %v431
    %v464 = vcvt.s32.f32 %v432
    %v465 = vcvt.s32.f32 %v433
    %v466 = vcvt.s32.f32 %v434
    %v467 = vcvt.s32.f32 %v435
    %v468 = vcvt.s32.f32 %v436
    %v469 = vpack.c.bf16 %v439, %v437
    %v470 = vpack.c.bf16 %v440, %v438
    %v471 = vpack.c.bf16 %v443, %v441
    %v472 = vpack.c.bf16 %v444, %v442
    %v473 = vpack.c.bf16 %v447, %v445
    %v474 = vpack.c.bf16 %v448, %v446
    %v475 = vpack.c.bf16 %v451, %v449
    %v476 = vpack.c.bf16 %v452, %v450
    %v477 = vpack.c.bf16 %v455, %v453
    %v478 = vpack.c.bf16 %v456, %v454
    %v479 = vpack.c.bf16 %v459, %v457
    %v480 = vpack.c.bf16 %v460, %v458
    %v481 = vpack.c.bf16 %v463, %v461
    %v482 = vpack.c.bf16 %v464, %v462
    %v483 = vpack.c.bf16 %v467, %v465
    %v484 = vpack.c.bf16 %v468, %v466
    %vm485 = vcmp.eq.s32.totalorder %v117, %v136
    %vm486 = vcmp.eq.s32.totalorder %v117, %v140
    %vm487 = vcmp.eq.s32.totalorder %v118, %v136
    %vm488 = vcmp.eq.s32.totalorder %v118, %v140
    %vm489 = vcmp.eq.s32.totalorder %v119, %v136
    %vm490 = vcmp.eq.s32.totalorder %v119, %v140
    %vm491 = vcmp.eq.s32.totalorder %v120, %v136
    %vm492 = vcmp.eq.s32.totalorder %v120, %v140
    %vm493 = vcmp.eq.s32.totalorder %v121, %v136
    %vm494 = vcmp.eq.s32.totalorder %v121, %v140
    %vm495 = vcmp.eq.s32.totalorder %v122, %v136
    %vm496 = vcmp.eq.s32.totalorder %v122, %v140
    %vm497 = vcmp.eq.s32.totalorder %v123, %v136
    %vm498 = vcmp.eq.s32.totalorder %v123, %v140
    %vm499 = vcmp.eq.s32.totalorder %v124, %v136
    %vm500 = vcmp.eq.s32.totalorder %v124, %v140
    %vm501 = vcmp.eq.s32.totalorder %v125, %v136
    %vm502 = vcmp.eq.s32.totalorder %v125, %v140
    %vm503 = vcmp.eq.s32.totalorder %v126, %v136
    %vm504 = vcmp.eq.s32.totalorder %v126, %v140
    %vm505 = vcmp.eq.s32.totalorder %v127, %v136
    %vm506 = vcmp.eq.s32.totalorder %v127, %v140
    %vm507 = vcmp.eq.s32.totalorder %v128, %v136
    %vm508 = vcmp.eq.s32.totalorder %v128, %v140
    %vm509 = vcmp.eq.s32.totalorder %v129, %v136
    %vm510 = vcmp.eq.s32.totalorder %v129, %v140
    %vm511 = vcmp.eq.s32.totalorder %v130, %v136
    %vm512 = vcmp.eq.s32.totalorder %v130, %v140
    %vm513 = vcmp.eq.s32.totalorder %v131, %v136
    %vm514 = vcmp.eq.s32.totalorder %v131, %v140
    %vm515 = vcmp.eq.s32.totalorder %v132, %v136
    %vm516 = vcmp.eq.s32.totalorder %v132, %v140
    %v517 = vsel %vm485, 1, 0
    %v518 = vsel %vm486, 1, 0
    %v519 = vsel %vm487, 1, 0
    %v520 = vsel %vm488, 1, 0
    %v521 = vsel %vm489, 1, 0
    %v522 = vsel %vm490, 1, 0
    %v523 = vsel %vm491, 1, 0
    %v524 = vsel %vm492, 1, 0
    %v525 = vsel %vm493, 1, 0
    %v526 = vsel %vm494, 1, 0
    %v527 = vsel %vm495, 1, 0
    %v528 = vsel %vm496, 1, 0
    %v529 = vsel %vm497, 1, 0
    %v530 = vsel %vm498, 1, 0
    %v531 = vsel %vm499, 1, 0
    %v532 = vsel %vm500, 1, 0
    %v533 = vsel %vm501, 1, 0
    %v534 = vsel %vm502, 1, 0
    %v535 = vsel %vm503, 1, 0
    %v536 = vsel %vm504, 1, 0
    %v537 = vsel %vm505, 1, 0
    %v538 = vsel %vm506, 1, 0
    %v539 = vsel %vm507, 1, 0
    %v540 = vsel %vm508, 1, 0
    %v541 = vsel %vm509, 1, 0
    %v542 = vsel %vm510, 1, 0
    %v543 = vsel %vm511, 1, 0
    %v544 = vsel %vm512, 1, 0
    %v545 = vsel %vm513, 1, 0
    %v546 = vsel %vm514, 1, 0
    %v547 = vsel %vm515, 1, 0
    %v548 = vsel %vm516, 1, 0
    %v549 = vcvt.s32.f32 %v517
    %v550 = vcvt.s32.f32 %v518
    %v551 = vcvt.s32.f32 %v519
    %v552 = vcvt.s32.f32 %v520
    %v553 = vcvt.s32.f32 %v521
    %v554 = vcvt.s32.f32 %v522
    %v555 = vcvt.s32.f32 %v523
    %v556 = vcvt.s32.f32 %v524
    %v557 = vcvt.s32.f32 %v525
    %v558 = vcvt.s32.f32 %v526
    %v559 = vcvt.s32.f32 %v527
    %v560 = vcvt.s32.f32 %v528
    %v561 = vcvt.s32.f32 %v529
    %v562 = vcvt.s32.f32 %v530
    %v563 = vcvt.s32.f32 %v531
    %v564 = vcvt.s32.f32 %v532
    %v565 = vcvt.s32.f32 %v533
    %v566 = vcvt.s32.f32 %v534
    %v567 = vcvt.s32.f32 %v535
    %v568 = vcvt.s32.f32 %v536
    %v569 = vcvt.s32.f32 %v537
    %v570 = vcvt.s32.f32 %v538
    %v571 = vcvt.s32.f32 %v539
    %v572 = vcvt.s32.f32 %v540
    %v573 = vcvt.s32.f32 %v541
    %v574 = vcvt.s32.f32 %v542
    %v575 = vcvt.s32.f32 %v543
    %v576 = vcvt.s32.f32 %v544
    %v577 = vcvt.s32.f32 %v545
    %v578 = vcvt.s32.f32 %v546
    %v579 = vcvt.s32.f32 %v547
    %v580 = vcvt.s32.f32 %v548
    %v581 = vpack.c.bf16 %v551, %v549
    %v582 = vpack.c.bf16 %v552, %v550
    %v583 = vpack.c.bf16 %v555, %v553
    %v584 = vpack.c.bf16 %v556, %v554
    %v585 = vpack.c.bf16 %v559, %v557
    %v586 = vpack.c.bf16 %v560, %v558
    %v587 = vpack.c.bf16 %v563, %v561
    %v588 = vpack.c.bf16 %v564, %v562
    %v589 = vpack.c.bf16 %v567, %v565
    %v590 = vpack.c.bf16 %v568, %v566
    %v591 = vpack.c.bf16 %v571, %v569
    %v592 = vpack.c.bf16 %v572, %v570
    %v593 = vpack.c.bf16 %v575, %v573
    %v594 = vpack.c.bf16 %v576, %v574
    %v595 = vpack.c.bf16 %v579, %v577
    %v596 = vpack.c.bf16 %v580, %v578
    %v597 = vld [vmem:[#allocation8] sm:$0xff]
    %v598 = vld [vmem:[#allocation8 + $0x8] sm:$0xff]
    %v599 = vld [vmem:[#allocation8 + $0x10] sm:$0xff]
    %v600 = vld [vmem:[#allocation8 + $0x18] sm:$0xff]
    %v601 = vld [vmem:[#allocation8 + $0x20] sm:$0xff]
    %v602 = vld [vmem:[#allocation8 + $0x28] sm:$0xff]
    %v603 = vld [vmem:[#allocation8 + $0x30] sm:$0xff]
    %v604 = vld [vmem:[#allocation8 + $0x38] sm:$0xff]
    %v605 = vld [vmem:[#allocation8 + $0x40] sm:$0xff]
    %v606 = vld [vmem:[#allocation8 + $0x48] sm:$0xff]
    %v607 = vld [vmem:[#allocation8 + $0x50] sm:$0xff]
    %v608 = vld [vmem:[#allocation8 + $0x58] sm:$0xff]
    %v609 = vld [vmem:[#allocation8 + $0x60] sm:$0xff]
    %v610 = vld [vmem:[#allocation8 + $0x68] sm:$0xff]
    %v611 = vld [vmem:[#allocation8 + $0x70] sm:$0xff]
    %v612 = vld [vmem:[#allocation8 + $0x78] sm:$0xff]
    %613 = vmatprep.subr.bf16.mxu0 %v484
    %614 = vmatpush1.bf16.xpose.msra.mxu0 %v483
    %615 = vmatprep.subr.bf16.mxu0 %v482
    %616 = vmatpush1.bf16.xpose.msra.mxu0 %v481
    %617 = vmatprep.subr.bf16.mxu0 %v480
    %618 = vmatpush1.bf16.xpose.msra.mxu0 %v479
    %619 = vmatprep.subr.bf16.mxu0 %v478
    %620 = vmatpush1.bf16.xpose.msra.mxu0 %v477
    %621 = vmatprep.subr.bf16.mxu0 %v476
    %622 = vmatpush1.bf16.xpose.msra.mxu0 %v475
    %623 = vmatprep.subr.bf16.mxu0 %v474
    %624 = vmatpush1.bf16.xpose.msra.mxu0 %v473
    %625 = vmatprep.subr.bf16.mxu0 %v472
    %626 = vmatpush1.bf16.xpose.msra.mxu0 %v471
    %627 = vmatprep.subr.bf16.mxu0 %v470
    %628 = vmatpush1.bf16.xpose.msra.mxu0 %v469
    %629 = vmatprep.subr.bf16.mxu0 0
    %630 = vmatpush2.bf16.xpose.msra.mxu0 0
    %631 = vmatprep.subr.bf16.mxu0 0
    %632 = vmatpush2.bf16.xpose.msra.mxu0 0
    %633 = vmatprep.subr.bf16.mxu0 0
    %634 = vmatpush2.bf16.xpose.msra.mxu0 0
    %635 = vmatprep.subr.bf16.mxu0 0
    %636 = vmatpush2.bf16.xpose.msra.mxu0 0
    %637 = vmatprep.subr.bf16.mxu0 0
    %638 = vmatpush2.bf16.xpose.msra.mxu0 0
    %639 = vmatprep.subr.bf16.mxu0 0
    %640 = vmatpush2.bf16.xpose.msra.mxu0 0
    %641 = vmatprep.subr.bf16.mxu0 0
    %642 = vmatpush2.bf16.xpose.msra.mxu0 0
    %643 = vmatprep.subr.bf16.mxu0 0
    %644 = vmatpush2.bf16.xpose.msra.mxu0 0
    %645 = vmatprep.mubr.bf16.mxu0 %v238
    %646 = vmatmul.mubr.bf16.gmra.mxu0 %v237
    %v647 = vpop.f32.mrf.mxu0
    %v648 = vadd.f32 0.0, %v647
    %v649 = vpop.f32.mrf.mxu0
    %v650 = vpop.f32.mrf.mxu0
    %v651 = vadd.f32 0.0, %v650
    %v652 = vpop.f32.mrf.mxu0
    %653 = vmatprep.mubr.bf16.mxu0 %v240
    %654 = vmatmul.mubr.bf16.gmra.mxu0 %v239
    %v655 = vpop.f32.mrf.mxu0
    %v656 = vadd.f32 0.0, %v655
    %v657 = vpop.f32.mrf.mxu0
    %v658 = vpop.f32.mrf.mxu0
    %v659 = vadd.f32 0.0, %v658
    %v660 = vpop.f32.mrf.mxu0
    %661 = vmatprep.mubr.bf16.mxu0 %v242
    %662 = vmatmul.mubr.bf16.gmra.mxu0 %v241
    %v663 = vpop.f32.mrf.mxu0
    %v664 = vadd.f32 0.0, %v663
    %v665 = vpop.f32.mrf.mxu0
    %v666 = vpop.f32.mrf.mxu0
    %v667 = vadd.f32 0.0, %v666
    %v668 = vpop.f32.mrf.mxu0
    %669 = vmatprep.mubr.bf16.mxu0 %v244
    %670 = vmatmul.mubr.bf16.gmra.mxu0 %v243
    %v671 = vpop.f32.mrf.mxu0
    %v672 = vadd.f32 0.0, %v671
    %v673 = vpop.f32.mrf.mxu0
    %v674 = vpop.f32.mrf.mxu0
    %v675 = vadd.f32 0.0, %v674
    %v676 = vpop.f32.mrf.mxu0
    %677 = vmatprep.mubr.bf16.mxu0 %v246
    %678 = vmatmul.mubr.bf16.gmra.mxu0 %v245
    %v679 = vpop.f32.mrf.mxu0
    %v680 = vadd.f32 0.0, %v679
    %v681 = vpop.f32.mrf.mxu0
    %v682 = vpop.f32.mrf.mxu0
    %v683 = vadd.f32 0.0, %v682
    %v684 = vpop.f32.mrf.mxu0
    %685 = vmatprep.mubr.bf16.mxu0 %v248
    %686 = vmatmul.mubr.bf16.gmra.mxu0 %v247
    %v687 = vpop.f32.mrf.mxu0
    %v688 = vadd.f32 0.0, %v687
    %v689 = vpop.f32.mrf.mxu0
    %v690 = vpop.f32.mrf.mxu0
    %v691 = vadd.f32 0.0, %v690
    %v692 = vpop.f32.mrf.mxu0
    %693 = vmatprep.mubr.bf16.mxu0 %v250
    %694 = vmatmul.mubr.bf16.gmra.mxu0 %v249
    %v695 = vpop.f32.mrf.mxu0
    %v696 = vadd.f32 0.0, %v695
    %v697 = vpop.f32.mrf.mxu0
    %v698 = vpop.f32.mrf.mxu0
    %v699 = vadd.f32 0.0, %v698
    %v700 = vpop.f32.mrf.mxu0
    %701 = vmatprep.mubr.bf16.mxu0 %v252
    %702 = vmatmul.mubr.bf16.gmra.mxu0 %v251
    %v703 = vpop.f32.mrf.mxu0
    %v704 = vadd.f32 0.0, %v703
    %v705 = vpop.f32.mrf.mxu0
    %v706 = vpop.f32.mrf.mxu0
    %v707 = vadd.f32 0.0, %v706
    %v708 = vpop.f32.mrf.mxu0
    %709 = vdwg.mxu0
    %v710 = vadd.f32 %v597, %v648
    %v711 = vadd.f32 %v598, %v651
    %v712 = vadd.f32 %v599, %v656
    %v713 = vadd.f32 %v600, %v659
    %v714 = vadd.f32 %v601, %v664
    %v715 = vadd.f32 %v602, %v667
    %v716 = vadd.f32 %v603, %v672
    %v717 = vadd.f32 %v604, %v675
    %v718 = vadd.f32 %v605, %v680
    %v719 = vadd.f32 %v606, %v683
    %v720 = vadd.f32 %v607, %v688
    %v721 = vadd.f32 %v608, %v691
    %v722 = vadd.f32 %v609, %v696
    %v723 = vadd.f32 %v610, %v699
    %v724 = vadd.f32 %v611, %v704
    %v725 = vadd.f32 %v612, %v707
    %726 = vst [vmem:[#allocation8] sm:$0xff] %v710
    %727 = vst [vmem:[#allocation8 + $0x8] sm:$0xff] %v711
    %728 = vst [vmem:[#allocation8 + $0x10] sm:$0xff] %v712
    %729 = vst [vmem:[#allocation8 + $0x18] sm:$0xff] %v713
    %730 = vst [vmem:[#allocation8 + $0x20] sm:$0xff] %v714
    %731 = vst [vmem:[#allocation8 + $0x28] sm:$0xff] %v715
    %732 = vst [vmem:[#allocation8 + $0x30] sm:$0xff] %v716
    %733 = vst [vmem:[#allocation8 + $0x38] sm:$0xff] %v717
    %734 = vst [vmem:[#allocation8 + $0x40] sm:$0xff] %v718
    %735 = vst [vmem:[#allocation8 + $0x48] sm:$0xff] %v719
    %736 = vst [vmem:[#allocation8 + $0x50] sm:$0xff] %v720
    %737 = vst [vmem:[#allocation8 + $0x58] sm:$0xff] %v721
    %738 = vst [vmem:[#allocation8 + $0x60] sm:$0xff] %v722
    %739 = vst [vmem:[#allocation8 + $0x68] sm:$0xff] %v723
    %740 = vst [vmem:[#allocation8 + $0x70] sm:$0xff] %v724
    %741 = vst [vmem:[#allocation8 + $0x78] sm:$0xff] %v725
    %v742 = vld [vmem:[#allocation2] sm:$0xff]
    %v743 = vld [vmem:[#allocation2 + $0x8] sm:$0xff]
    %v744 = vld [vmem:[#allocation2 + $0x10] sm:$0xff]
    %v745 = vld [vmem:[#allocation2 + $0x18] sm:$0xff]
    %v746 = vld [vmem:[#allocation2 + $0x20] sm:$0xff]
    %v747 = vld [vmem:[#allocation2 + $0x28] sm:$0xff]
    %v748 = vld [vmem:[#allocation2 + $0x30] sm:$0xff]
    %v749 = vld [vmem:[#allocation2 + $0x38] sm:$0xff]
    %v750 = vld [vmem:[#allocation2 + $0x40] sm:$0xff]
    %v751 = vld [vmem:[#allocation2 + $0x48] sm:$0xff]
    %v752 = vld [vmem:[#allocation2 + $0x50] sm:$0xff]
    %v753 = vld [vmem:[#allocation2 + $0x58] sm:$0xff]
    %v754 = vld [vmem:[#allocation2 + $0x60] sm:$0xff]
    %v755 = vld [vmem:[#allocation2 + $0x68] sm:$0xff]
    %v756 = vld [vmem:[#allocation2 + $0x70] sm:$0xff]
    %v757 = vld [vmem:[#allocation2 + $0x78] sm:$0xff]
    %758 = vmatprep.subr.bf16.mxu0 %v596
    %759 = vmatpush1.bf16.xpose.msra.mxu0 %v595
    %760 = vmatprep.subr.bf16.mxu0 %v594
    %761 = vmatpush1.bf16.xpose.msra.mxu0 %v593
    %762 = vmatprep.subr.bf16.mxu0 %v592
    %763 = vmatpush1.bf16.xpose.msra.mxu0 %v591
    %764 = vmatprep.subr.bf16.mxu0 %v590
    %765 = vmatpush1.bf16.xpose.msra.mxu0 %v589
    %766 = vmatprep.subr.bf16.mxu0 %v588
    %767 = vmatpush1.bf16.xpose.msra.mxu0 %v587
    %768 = vmatprep.subr.bf16.mxu0 %v586
    %769 = vmatpush1.bf16.xpose.msra.mxu0 %v585
    %770 = vmatprep.subr.bf16.mxu0 %v584
    %771 = vmatpush1.bf16.xpose.msra.mxu0 %v583
    %772 = vmatprep.subr.bf16.mxu0 %v582
    %773 = vmatpush1.bf16.xpose.msra.mxu0 %v581
    %774 = vmatprep.subr.bf16.mxu0 0
    %775 = vmatpush2.bf16.xpose.msra.mxu0 0
    %776 = vmatprep.subr.bf16.mxu0 0
    %777 = vmatpush2.bf16.xpose.msra.mxu0 0
    %778 = vmatprep.subr.bf16.mxu0 0
    %779 = vmatpush2.bf16.xpose.msra.mxu0 0
    %780 = vmatprep.subr.bf16.mxu0 0
    %781 = vmatpush2.bf16.xpose.msra.mxu0 0
    %782 = vmatprep.subr.bf16.mxu0 0
    %783 = vmatpush2.bf16.xpose.msra.mxu0 0
    %784 = vmatprep.subr.bf16.mxu0 0
    %785 = vmatpush2.bf16.xpose.msra.mxu0 0
    %786 = vmatprep.subr.bf16.mxu0 0
    %787 = vmatpush2.bf16.xpose.msra.mxu0 0
    %788 = vmatprep.subr.bf16.mxu0 0
    %789 = vmatpush2.bf16.xpose.msra.mxu0 0
    %790 = vmatprep.mubr.bf16.mxu0 %v358
    %791 = vmatmul.mubr.bf16.gmra.mxu0 %v357
    %v792 = vpop.f32.mrf.mxu0
    %v793 = vadd.f32 0.0, %v792
    %v794 = vpop.f32.mrf.mxu0
    %v795 = vpop.f32.mrf.mxu0
    %v796 = vadd.f32 0.0, %v795
    %v797 = vpop.f32.mrf.mxu0
    %798 = vmatprep.mubr.bf16.mxu0 %v360
    %799 = vmatmul.mubr.bf16.gmra.mxu0 %v359
    %v800 = vpop.f32.mrf.mxu0
    %v801 = vadd.f32 0.0, %v800
    %v802 = vpop.f32.mrf.mxu0
    %v803 = vpop.f32.mrf.mxu0
    %v804 = vadd.f32 0.0, %v803
    %v805 = vpop.f32.mrf.mxu0
    %806 = vmatprep.mubr.bf16.mxu0 %v362
    %807 = vmatmul.mubr.bf16.gmra.mxu0 %v361
    %v808 = vpop.f32.mrf.mxu0
    %v809 = vadd.f32 0.0, %v808
    %v810 = vpop.f32.mrf.mxu0
    %v811 = vpop.f32.mrf.mxu0
    %v812 = vadd.f32 0.0, %v811
    %v813 = vpop.f32.mrf.mxu0
    %814 = vmatprep.mubr.bf16.mxu0 %v364
    %815 = vmatmul.mubr.bf16.gmra.mxu0 %v363
    %v816 = vpop.f32.mrf.mxu0
    %v817 = vadd.f32 0.0, %v816
    %v818 = vpop.f32.mrf.mxu0
    %v819 = vpop.f32.mrf.mxu0
    %v820 = vadd.f32 0.0, %v819
    %v821 = vpop.f32.mrf.mxu0
    %822 = vmatprep.mubr.bf16.mxu0 %v366
    %823 = vmatmul.mubr.bf16.gmra.mxu0 %v365
    %v824 = vpop.f32.mrf.mxu0
    %v825 = vadd.f32 0.0, %v824
    %v826 = vpop.f32.mrf.mxu0
    %v827 = vpop.f32.mrf.mxu0
    %v828 = vadd.f32 0.0, %v827
    %v829 = vpop.f32.mrf.mxu0
    %830 = vmatprep.mubr.bf16.mxu0 %v368
    %831 = vmatmul.mubr.bf16.gmra.mxu0 %v367
    %v832 = vpop.f32.mrf.mxu0
    %v833 = vadd.f32 0.0, %v832
    %v834 = vpop.f32.mrf.mxu0
    %v835 = vpop.f32.mrf.mxu0
    %v836 = vadd.f32 0.0, %v835
    %v837 = vpop.f32.mrf.mxu0
    %838 = vmatprep.mubr.bf16.mxu0 %v370
    %839 = vmatmul.mubr.bf16.gmra.mxu0 %v369
    %v840 = vpop.f32.mrf.mxu0
    %v841 = vadd.f32 0.0, %v840
    %v842 = vpop.f32.mrf.mxu0
    %v843 = vpop.f32.mrf.mxu0
    %v844 = vadd.f32 0.0, %v843
    %v845 = vpop.f32.mrf.mxu0
    %846 = vmatprep.mubr.bf16.mxu0 %v372
    %847 = vmatmul.mubr.bf16.gmra.mxu0 %v371
    %v848 = vpop.f32.mrf.mxu0
    %v849 = vadd.f32 0.0, %v848
    %v850 = vpop.f32.mrf.mxu0
    %v851 = vpop.f32.mrf.mxu0
    %v852 = vadd.f32 0.0, %v851
    %v853 = vpop.f32.mrf.mxu0
    %854 = vdwg.mxu0
    %v855 = vadd.f32 %v742, %v793
    %v856 = vadd.f32 %v743, %v796
    %v857 = vadd.f32 %v744, %v801
    %v858 = vadd.f32 %v745, %v804
    %v859 = vadd.f32 %v746, %v809
    %v860 = vadd.f32 %v747, %v812
    %v861 = vadd.f32 %v748, %v817
    %v862 = vadd.f32 %v749, %v820
    %v863 = vadd.f32 %v750, %v825
    %v864 = vadd.f32 %v751, %v828
    %v865 = vadd.f32 %v752, %v833
    %v866 = vadd.f32 %v753, %v836
    %v867 = vadd.f32 %v754, %v841
    %v868 = vadd.f32 %v755, %v844
    %v869 = vadd.f32 %v756, %v849
    %v870 = vadd.f32 %v757, %v852
    %871 = vst [vmem:[#allocation2] sm:$0xff] %v855
    %872 = vst [vmem:[#allocation2 + $0x8] sm:$0xff] %v856
    %873 = vst [vmem:[#allocation2 + $0x10] sm:$0xff] %v857
    %874 = vst [vmem:[#allocation2 + $0x18] sm:$0xff] %v858
    %875 = vst [vmem:[#allocation2 + $0x20] sm:$0xff] %v859
    %876 = vst [vmem:[#allocation2 + $0x28] sm:$0xff] %v860
    %877 = vst [vmem:[#allocation2 + $0x30] sm:$0xff] %v861
    %878 = vst [vmem:[#allocation2 + $0x38] sm:$0xff] %v862
    %879 = vst [vmem:[#allocation2 + $0x40] sm:$0xff] %v863
    %880 = vst [vmem:[#allocation2 + $0x48] sm:$0xff] %v864
    %881 = vst [vmem:[#allocation2 + $0x50] sm:$0xff] %v865
    %882 = vst [vmem:[#allocation2 + $0x58] sm:$0xff] %v866
    %883 = vst [vmem:[#allocation2 + $0x60] sm:$0xff] %v867
    %884 = vst [vmem:[#allocation2 + $0x68] sm:$0xff] %v868
    %885 = vst [vmem:[#allocation2 + $0x70] sm:$0xff] %v869
    %886 = vst [vmem:[#allocation2 + $0x78] sm:$0xff] %v870
    // Predicated region
    $region22: #{tpu_custom_call.1} parent=1 // pred_check
      %p887 = pneg %p37
    $region23: #{tpu_custom_call.1} parent=1 // pred_check_branch
      %889 = sbr.rel (%p887) target = $region25
    $region24: #{tpu_custom_call.1} parent=1 // pred_region
      %v890 = vld [vmem:[#allocation8] sm:$0xff]
      %v891 = vld [vmem:[#allocation8 + $0x8] sm:$0xff]
      %v892 = vld [vmem:[#allocation8 + $0x10] sm:$0xff]
      %v893 = vld [vmem:[#allocation8 + $0x18] sm:$0xff]
      %v894 = vld [vmem:[#allocation8 + $0x20] sm:$0xff]
      %v895 = vld [vmem:[#allocation8 + $0x28] sm:$0xff]
      %v896 = vld [vmem:[#allocation8 + $0x30] sm:$0xff]
      %v897 = vld [vmem:[#allocation8 + $0x38] sm:$0xff]
      %v898 = vld [vmem:[#allocation8 + $0x40] sm:$0xff]
      %v899 = vld [vmem:[#allocation8 + $0x48] sm:$0xff]
      %v900 = vld [vmem:[#allocation8 + $0x50] sm:$0xff]
      %v901 = vld [vmem:[#allocation8 + $0x58] sm:$0xff]
      %v902 = vld [vmem:[#allocation8 + $0x60] sm:$0xff]
      %v903 = vld [vmem:[#allocation8 + $0x68] sm:$0xff]
      %v904 = vld [vmem:[#allocation8 + $0x70] sm:$0xff]
      %v905 = vld [vmem:[#allocation8 + $0x78] sm:$0xff]
      %v906 = vld [vmem:[#allocation2] sm:$0xff]
      %v907 = vld [vmem:[#allocation2 + $0x8] sm:$0xff]
      %v908 = vld [vmem:[#allocation2 + $0x10] sm:$0xff]
      %v909 = vld [vmem:[#allocation2 + $0x18] sm:$0xff]
      %v910 = vld [vmem:[#allocation2 + $0x20] sm:$0xff]
      %v911 = vld [vmem:[#allocation2 + $0x28] sm:$0xff]
      %v912 = vld [vmem:[#allocation2 + $0x30] sm:$0xff]
      %v913 = vld [vmem:[#allocation2 + $0x38] sm:$0xff]
      %v914 = vld [vmem:[#allocation2 + $0x40] sm:$0xff]
      %v915 = vld [vmem:[#allocation2 + $0x48] sm:$0xff]
      %v916 = vld [vmem:[#allocation2 + $0x50] sm:$0xff]
      %v917 = vld [vmem:[#allocation2 + $0x58] sm:$0xff]
      %v918 = vld [vmem:[#allocation2 + $0x60] sm:$0xff]
      %v919 = vld [vmem:[#allocation2 + $0x68] sm:$0xff]
      %v920 = vld [vmem:[#allocation2 + $0x70] sm:$0xff]
      %v921 = vld [vmem:[#allocation2 + $0x78] sm:$0xff]
      %v922 = vmax.f32 %v890, %v906
      %v923 = vmax.f32 %v891, %v907
      %v924 = vmax.f32 %v892, %v908
      %v925 = vmax.f32 %v893, %v909
      %v926 = vmax.f32 %v894, %v910
      %v927 = vmax.f32 %v895, %v911
      %v928 = vmax.f32 %v896, %v912
      %v929 = vmax.f32 %v897, %v913
      %v930 = vmax.f32 %v898, %v914
      %v931 = vmax.f32 %v899, %v915
      %v932 = vmax.f32 %v900, %v916
      %v933 = vmax.f32 %v901, %v917
      %v934 = vmax.f32 %v902, %v918
      %v935 = vmax.f32 %v903, %v919
      %v936 = vmax.f32 %v904, %v920
      %v937 = vmax.f32 %v905, %v921
      %v938 = vlaneseq
      %v939 = vand.u32 %v938, 127
      %v940 = vadd.s32 %v939, %v116
      %vm941 = vcmp.eq.s32.totalorder %v99, %v940
      %vm942 = vcmp.eq.s32.totalorder %v100, %v940
      %vm943 = vcmp.eq.s32.totalorder %v101, %v940
      %vm944 = vcmp.eq.s32.totalorder %v102, %v940
      %vm945 = vcmp.eq.s32.totalorder %v103, %v940
      %vm946 = vcmp.eq.s32.totalorder %v104, %v940
      %vm947 = vcmp.eq.s32.totalorder %v105, %v940
      %vm948 = vcmp.eq.s32.totalorder %v106, %v940
      %vm949 = vcmp.eq.s32.totalorder %v107, %v940
      %vm950 = vcmp.eq.s32.totalorder %v108, %v940
      %vm951 = vcmp.eq.s32.totalorder %v109, %v940
      %vm952 = vcmp.eq.s32.totalorder %v110, %v940
      %vm953 = vcmp.eq.s32.totalorder %v111, %v940
      %vm954 = vcmp.eq.s32.totalorder %v112, %v940
      %vm955 = vcmp.eq.s32.totalorder %v113, %v940
      %vm956 = vcmp.eq.s32.totalorder %v114, %v940
      %v957 = vsel %vm941, 1, 0
      %v958 = vsel %vm942, 1, 0
      %v959 = vsel %vm943, 1, 0
      %v960 = vsel %vm944, 1, 0
      %v961 = vsel %vm945, 1, 0
      %v962 = vsel %vm946, 1, 0
      %v963 = vsel %vm947, 1, 0
      %v964 = vsel %vm948, 1, 0
      %v965 = vsel %vm949, 1, 0
      %v966 = vsel %vm950, 1, 0
      %v967 = vsel %vm951, 1, 0
      %v968 = vsel %vm952, 1, 0
      %v969 = vsel %vm953, 1, 0
      %v970 = vsel %vm954, 1, 0
      %v971 = vsel %vm955, 1, 0
      %v972 = vsel %vm956, 1, 0
      %v973 = vcvt.s32.f32 %v957
      %v974 = vcvt.s32.f32 %v958
      %v975 = vcvt.s32.f32 %v959
      %v976 = vcvt.s32.f32 %v960
      %v977 = vcvt.s32.f32 %v961
      %v978 = vcvt.s32.f32 %v962
      %v979 = vcvt.s32.f32 %v963
      %v980 = vcvt.s32.f32 %v964
      %v981 = vcvt.s32.f32 %v965
      %v982 = vcvt.s32.f32 %v966
      %v983 = vcvt.s32.f32 %v967
      %v984 = vcvt.s32.f32 %v968
      %v985 = vcvt.s32.f32 %v969
      %v986 = vcvt.s32.f32 %v970
      %v987 = vcvt.s32.f32 %v971
      %v988 = vcvt.s32.f32 %v972
      %v989 = vadd.f32 %v922, %v973
      %v990 = vadd.f32 %v923, %v974
      %v991 = vadd.f32 %v924, %v975
      %v992 = vadd.f32 %v925, %v976
      %v993 = vadd.f32 %v926, %v977
      %v994 = vadd.f32 %v927, %v978
      %v995 = vadd.f32 %v928, %v979
      %v996 = vadd.f32 %v929, %v980
      %v997 = vadd.f32 %v930, %v981
      %v998 = vadd.f32 %v931, %v982
      %v999 = vadd.f32 %v932, %v983
      %v1000 = vadd.f32 %v933, %v984
      %v1001 = vadd.f32 %v934, %v985
      %v1002 = vadd.f32 %v935, %v986
      %v1003 = vadd.f32 %v936, %v987
      %v1004 = vadd.f32 %v937, %v988
      %1005 = vadd.xlane.f32.xlu0 %v989
      %v1006 = vpop.xlane.xlu0 %1005
      %1007 = vadd.xlane.f32.xlu0 %v990
      %v1008 = vpop.xlane.xlu0 %1007
      %1009 = vadd.xlane.f32.xlu0 %v991
      %v1010 = vpop.xlane.xlu0 %1009
      %1011 = vadd.xlane.f32.xlu0 %v992
      %v1012 = vpop.xlane.xlu0 %1011
      %1013 = vadd.xlane.f32.xlu0 %v993
      %v1014 = vpop.xlane.xlu0 %1013
      %1015 = vadd.xlane.f32.xlu0 %v994
      %v1016 = vpop.xlane.xlu0 %1015
      %1017 = vadd.xlane.f32.xlu0 %v995
      %v1018 = vpop.xlane.xlu0 %1017
      %1019 = vadd.xlane.f32.xlu0 %v996
      %v1020 = vpop.xlane.xlu0 %1019
      %1021 = vadd.xlane.f32.xlu0 %v997
      %v1022 = vpop.xlane.xlu0 %1021
      %1023 = vadd.xlane.f32.xlu0 %v998
      %v1024 = vpop.xlane.xlu0 %1023
      %1025 = vadd.xlane.f32.xlu0 %v999
      %v1026 = vpop.xlane.xlu0 %1025
      %1027 = vadd.xlane.f32.xlu0 %v1000
      %v1028 = vpop.xlane.xlu0 %1027
      %1029 = vadd.xlane.f32.xlu0 %v1001
      %v1030 = vpop.xlane.xlu0 %1029
      %1031 = vadd.xlane.f32.xlu0 %v1002
      %v1032 = vpop.xlane.xlu0 %1031
      %1033 = vadd.xlane.f32.xlu0 %v1003
      %v1034 = vpop.xlane.xlu0 %1033
      %1035 = vadd.xlane.f32.xlu0 %v1004
      %v1036 = vpop.xlane.xlu0 %1035
      %v1037 = vrcp.pop %v1006
      %v1038 = vrcp.pop %v1008
      %v1039 = vrcp.pop %v1010
      %v1040 = vrcp.pop %v1012
      %v1041 = vrcp.pop %v1014
      %v1042 = vrcp.pop %v1016
      %v1043 = vrcp.pop %v1018
      %v1044 = vrcp.pop %v1020
      %v1045 = vrcp.pop %v1022
      %v1046 = vrcp.pop %v1024
      %v1047 = vrcp.pop %v1026
      %v1048 = vrcp.pop %v1028
      %v1049 = vrcp.pop %v1030
      %v1050 = vrcp.pop %v1032
      %v1051 = vrcp.pop %v1034
      %v1052 = vrcp.pop %v1036
      %v1053 = vmul.f32 %v1006, %v1037
      %v1054 = vmul.f32 %v1008, %v1038
      %v1055 = vmul.f32 %v1010, %v1039
      %v1056 = vmul.f32 %v1012, %v1040
      %v1057 = vmul.f32 %v1014, %v1041
      %v1058 = vmul.f32 %v1016, %v1042
      %v1059 = vmul.f32 %v1018, %v1043
      %v1060 = vmul.f32 %v1020, %v1044
      %v1061 = vmul.f32 %v1022, %v1045
      %v1062 = vmul.f32 %v1024, %v1046
      %v1063 = vmul.f32 %v1026, %v1047
      %v1064 = vmul.f32 %v1028, %v1048
      %v1065 = vmul.f32 %v1030, %v1049
      %v1066 = vmul.f32 %v1032, %v1050
      %v1067 = vmul.f32 %v1034, %v1051
      %v1068 = vmul.f32 %v1036, %v1052
      %v1069 = vsub.f32 2.0, %v1053
      %v1070 = vsub.f32 2.0, %v1054
      %v1071 = vsub.f32 2.0, %v1055
      %v1072 = vsub.f32 2.0, %v1056
      %v1073 = vsub.f32 2.0, %v1057
      %v1074 = vsub.f32 2.0, %v1058
      %v1075 = vsub.f32 2.0, %v1059
      %v1076 = vsub.f32 2.0, %v1060
      %v1077 = vsub.f32 2.0, %v1061
      %v1078 = vsub.f32 2.0, %v1062
      %v1079 = vsub.f32 2.0, %v1063
      %v1080 = vsub.f32 2.0, %v1064
      %v1081 = vsub.f32 2.0, %v1065
      %v1082 = vsub.f32 2.0, %v1066
      %v1083 = vsub.f32 2.0, %v1067
      %v1084 = vsub.f32 2.0, %v1068
      %v1085 = vmul.f32 %v1037, %v1069
      %v1086 = vmul.f32 %v1038, %v1070
      %v1087 = vmul.f32 %v1039, %v1071
      %v1088 = vmul.f32 %v1040, %v1072
      %v1089 = vmul.f32 %v1041, %v1073
      %v1090 = vmul.f32 %v1042, %v1074
      %v1091 = vmul.f32 %v1043, %v1075
      %v1092 = vmul.f32 %v1044, %v1076
      %v1093 = vmul.f32 %v1045, %v1077
      %v1094 = vmul.f32 %v1046, %v1078
      %v1095 = vmul.f32 %v1047, %v1079
      %v1096 = vmul.f32 %v1048, %v1080
      %v1097 = vmul.f32 %v1049, %v1081
      %v1098 = vmul.f32 %v1050, %v1082
      %v1099 = vmul.f32 %v1051, %v1083
      %v1100 = vmul.f32 %v1052, %v1084
      %v1101 = vmul.f32 %v1006, %v1085
      %v1102 = vmul.f32 %v1008, %v1086
      %v1103 = vmul.f32 %v1010, %v1087
      %v1104 = vmul.f32 %v1012, %v1088
      %v1105 = vmul.f32 %v1014, %v1089
      %v1106 = vmul.f32 %v1016, %v1090
      %v1107 = vmul.f32 %v1018, %v1091
      %v1108 = vmul.f32 %v1020, %v1092
      %v1109 = vmul.f32 %v1022, %v1093
      %v1110 = vmul.f32 %v1024, %v1094
      %v1111 = vmul.f32 %v1026, %v1095
      %v1112 = vmul.f32 %v1028, %v1096
      %v1113 = vmul.f32 %v1030, %v1097
      %v1114 = vmul.f32 %v1032, %v1098
      %v1115 = vmul.f32 %v1034, %v1099
      %v1116 = vmul.f32 %v1036, %v1100
      %v1117 = vsub.f32 2.0, %v1101
      %v1118 = vsub.f32 2.0, %v1102
      %v1119 = vsub.f32 2.0, %v1103
      %v1120 = vsub.f32 2.0, %v1104
      %v1121 = vsub.f32 2.0, %v1105
      %v1122 = vsub.f32 2.0, %v1106
      %v1123 = vsub.f32 2.0, %v1107
      %v1124 = vsub.f32 2.0, %v1108
      %v1125 = vsub.f32 2.0, %v1109
      %v1126 = vsub.f32 2.0, %v1110
      %v1127 = vsub.f32 2.0, %v1111
      %v1128 = vsub.f32 2.0, %v1112
      %v1129 = vsub.f32 2.0, %v1113
      %v1130 = vsub.f32 2.0, %v1114
      %v1131 = vsub.f32 2.0, %v1115
      %v1132 = vsub.f32 2.0, %v1116
      %v1133 = vmul.f32 %v1085, %v1117
      %v1134 = vmul.f32 %v1086, %v1118
      %v1135 = vmul.f32 %v1087, %v1119
      %v1136 = vmul.f32 %v1088, %v1120
      %v1137 = vmul.f32 %v1089, %v1121
      %v1138 = vmul.f32 %v1090, %v1122
      %v1139 = vmul.f32 %v1091, %v1123
      %v1140 = vmul.f32 %v1092, %v1124
      %v1141 = vmul.f32 %v1093, %v1125
      %v1142 = vmul.f32 %v1094, %v1126
      %v1143 = vmul.f32 %v1095, %v1127
      %v1144 = vmul.f32 %v1096, %v1128
      %v1145 = vmul.f32 %v1097, %v1129
      %v1146 = vmul.f32 %v1098, %v1130
      %v1147 = vmul.f32 %v1099, %v1131
      %v1148 = vmul.f32 %v1100, %v1132
      %v1149 = vmul.f32 %v989, %v1133
      %v1150 = vmul.f32 %v990, %v1134
      %v1151 = vmul.f32 %v991, %v1135
      %v1152 = vmul.f32 %v992, %v1136
      %v1153 = vmul.f32 %v993, %v1137
      %v1154 = vmul.f32 %v994, %v1138
      %v1155 = vmul.f32 %v995, %v1139
      %v1156 = vmul.f32 %v996, %v1140
      %v1157 = vmul.f32 %v997, %v1141
      %v1158 = vmul.f32 %v998, %v1142
      %v1159 = vmul.f32 %v999, %v1143
      %v1160 = vmul.f32 %v1000, %v1144
      %v1161 = vmul.f32 %v1001, %v1145
      %v1162 = vmul.f32 %v1002, %v1146
      %v1163 = vmul.f32 %v1003, %v1147
      %v1164 = vmul.f32 %v1004, %v1148
      %1165 = vst [vmem:[#allocation8] sm:$0xff] %v1149
      %1166 = vst [vmem:[#allocation8 + $0x8] sm:$0xff] %v1150
      %1167 = vst [vmem:[#allocation8 + $0x10] sm:$0xff] %v1151
      %1168 = vst [vmem:[#allocation8 + $0x18] sm:$0xff] %v1152
      %1169 = vst [vmem:[#allocation8 + $0x20] sm:$0xff] %v1153
      %1170 = vst [vmem:[#allocation8 + $0x28] sm:$0xff] %v1154
      %1171 = vst [vmem:[#allocation8 + $0x30] sm:$0xff] %v1155
      %1172 = vst [vmem:[#allocation8 + $0x38] sm:$0xff] %v1156
      %1173 = vst [vmem:[#allocation8 + $0x40] sm:$0xff] %v1157
      %1174 = vst [vmem:[#allocation8 + $0x48] sm:$0xff] %v1158
      %1175 = vst [vmem:[#allocation8 + $0x50] sm:$0xff] %v1159
      %1176 = vst [vmem:[#allocation8 + $0x58] sm:$0xff] %v1160
      %1177 = vst [vmem:[#allocation8 + $0x60] sm:$0xff] %v1161
      %1178 = vst [vmem:[#allocation8 + $0x68] sm:$0xff] %v1162
      %1179 = vst [vmem:[#allocation8 + $0x70] sm:$0xff] %v1163
      %1180 = vst [vmem:[#allocation8 + $0x78] sm:$0xff] %v1164
    $region25: #{tpu_custom_call.1} parent=1 // pred_fallthru
      _
    // Predicated region
    $region26: #{tpu_custom_call.1} parent=1 // pred_check
      _
    $region27: #{tpu_custom_call.1} parent=1 // pred_check_branch
      %1182 = sbr.rel (0) target = $region29
    $region28: #{tpu_custom_call.1} parent=1 // pred_region
      %s1184 = ssub.s32 2048, 2048
      %1185 = vsyncadd [#allocation5], %s1184
      %s1186 = sshll.u32 [#allocation8], 4
      %s1187 = int_to_ptr.vmem [resolvable:$true] %s1186
      %1192 = dma.vmem_to_hbm [thread:$0]  %s1187, 2048, %s2, [#allocation5], 128, 128, 8
    $region29: #{tpu_custom_call.1} parent=1 // pred_fallthru
      _
    // Predicated region
    $region30: #{tpu_custom_call.1} parent=1 // pred_check
      _
    $region31: #{tpu_custom_call.1} parent=1 // pred_check_branch
      %1194 = sbr.rel (0) target = $region33
    $region32: #{tpu_custom_call.1} parent=1 // pred_region
      %1195 = dma.done [#allocation5], 2048
    $region33: #{tpu_custom_call.1} parent=1 // pred_fallthru
      _
    %1196 = vsyncpa [#allocation4], 1
    %1197 = vsyncpa [#allocation7], 1
    %1198 = vsyncpa [#allocation5], 1

</llo_original>
